<compile_context>
chip_gen: v7x
topology: tpu7x:2x2x1
jax: 0.10.0
libtpu: 0.0.40
codegen_flags: <defaults>
</compile_context>

<pallas_src>
import functools

import jax
import jax.numpy as jnp
from jax.experimental import pallas as pl
from jax.experimental.pallas import tpu as pltpu

_LN_EPS = 1e-5


def _erf(x):
    # Abramowitz & Stegun 7.1.26 polynomial (max abs err ~1.5e-7). Built only
    # from exp/abs/where so it lowers cleanly through Mosaic; matches PyTorch's
    # exact (erf-based) GELU to well below test tolerance.
    p = 0.3275911
    a1, a2, a3, a4, a5 = (0.254829592, -0.284496736, 1.421413741,
                          -1.453152027, 1.061405429)
    ax = jnp.abs(x)
    t = 1.0 / (1.0 + p * ax)
    poly = t * (a1 + t * (a2 + t * (a3 + t * (a4 + t * a5))))
    y = 1.0 - poly * jnp.exp(-ax * ax)
    return jnp.where(x >= 0, y, -y)


def _gelu_exact(x):
    return 0.5 * x * (1.0 + _erf(x * (2.0 ** -0.5)))


def _softmax_lastdim(x):
    m = jnp.max(x, axis=-1, keepdims=True)
    e = jnp.exp(x - m)
    return e / jnp.sum(e, axis=-1, keepdims=True)


def _cross_block_kernel(x0_ref, x1_ref,
                        wqk_ref, bqk_ref,
                        wv_ref, bv_ref,
                        wo_ref, bo_ref,
                        w1_ref, b1_ref,
                        g_ref, beta_ref,
                        w2_ref, b2_ref,
                        y0_ref, y1_ref,
                        *, num_heads, scale):
    f32 = jnp.float32
    x0 = x0_ref[0].astype(f32)            # (N, D)
    x1 = x1_ref[0].astype(f32)
    n, d = x0.shape
    dh = d // num_heads
    s = scale ** 0.5

    wqk = wqk_ref[...]                    # (D, D)   already (in, out)
    wv = wv_ref[...]
    wo = wo_ref[...]
    bqk = bqk_ref[...]                    # (1, D)
    bv = bv_ref[...]
    bo = bo_ref[...]

    # Projections — all MXU matmuls with f32 accumulation.
    qk0 = jnp.dot(x0, wqk, preferred_element_type=f32) + bqk
    qk1 = jnp.dot(x1, wqk, preferred_element_type=f32) + bqk
    v0 = jnp.dot(x0, wv, preferred_element_type=f32) + bv
    v1 = jnp.dot(x1, wv, preferred_element_type=f32) + bv

    # Bidirectional cross attention, head by head. Each per-head context is
    # immediately projected through the matching row-slice of W_out and
    # accumulated, so the (N, D) multi-head context is never concatenated.
    m0 = jnp.zeros((n, d), f32)
    m1 = jnp.zeros((n, d), f32)
    for h in range(num_heads):
        lo, hi = h * dh, (h + 1) * dh
        q0h = qk0[:, lo:hi] * s            # (N, dh)
        q1h = qk1[:, lo:hi] * s
        v0h = v0[:, lo:hi]
        v1h = v1[:, lo:hi]
        woh = wo[lo:hi, :]                 # (dh, D)

        sim = jnp.dot(q0h, q1h.T, preferred_element_type=f32)   # (N0, N1)
        attn01 = _softmax_lastdim(sim)
        attn10 = _softmax_lastdim(sim.T)

        ctx0 = jnp.dot(attn01, v1h, preferred_element_type=f32)  # (N0, dh)
        ctx1 = jnp.dot(attn10, v0h, preferred_element_type=f32)  # (N1, dh)
        m0 = m0 + jnp.dot(ctx0, woh, preferred_element_type=f32)
        m1 = m1 + jnp.dot(ctx1, woh, preferred_element_type=f32)
    m0 = m0 + bo
    m1 = m1 + bo

    w1 = w1_ref[...]                       # (2D, 2D)  (in, out)
    b1 = b1_ref[...]                       # (1, 2D)
    g = g_ref[...]                         # (1, 2D)
    beta = beta_ref[...]                   # (1, 2D)
    w2 = w2_ref[...]                       # (2D, D)
    b2 = b2_ref[...]                       # (1, D)
    w1_x = w1[:d, :]                       # rows acting on the x half of cat([x, m])
    w1_m = w1[d:, :]                       # rows acting on the m half

    def ffn_residual(x, m):
        # ffn(cat([x, m], -1)) without materializing the concat.
        z = (jnp.dot(x, w1_x, preferred_element_type=f32)
             + jnp.dot(m, w1_m, preferred_element_type=f32) + b1)   # (N, 2D)
        mu = jnp.mean(z, axis=-1, keepdims=True)
        var = jnp.mean(jnp.square(z - mu), axis=-1, keepdims=True)
        z = (z - mu) * jax.lax.rsqrt(var + _LN_EPS) * g + beta
        z = _gelu_exact(z)
        return x + jnp.dot(z, w2, preferred_element_type=f32) + b2

    y0_ref[0] = ffn_residual(x0, m0).astype(y0_ref.dtype)
    y1_ref[0] = ffn_residual(x1, m1).astype(y1_ref.dtype)


def cross_block(x0, x1, params, num_heads):
    """Pallas CrossBlock forward: returns (y0, y1), each (B, N, D)."""
    B, N, D = x0.shape
    assert D % num_heads == 0
    scale = float(D // num_heads) ** -0.5

    def t(w):   # nn.Linear stores (out, in); kernel consumes (in, out)
        return jnp.asarray(w, jnp.float32).T

    def row(b):
        return jnp.asarray(b, jnp.float32).reshape(1, -1)

    args = (
        x0, x1,
        t(params["w_qk"]), row(params["b_qk"]),
        t(params["w_v"]), row(params["b_v"]),
        t(params["w_out"]), row(params["b_out"]),
        t(params["w_ffn1"]), row(params["b_ffn1"]),
        row(params["ln_gamma"]), row(params["ln_beta"]),
        t(params["w_ffn2"]), row(params["b_ffn2"]),
    )

    def const2d(shape):
        return pl.BlockSpec(shape, lambda b: (0, 0))

    in_specs = [
        pl.BlockSpec((1, N, D), lambda b: (b, 0, 0)),      # x0
        pl.BlockSpec((1, N, D), lambda b: (b, 0, 0)),      # x1
        const2d((D, D)), const2d((1, D)),                  # to_qk
        const2d((D, D)), const2d((1, D)),                  # to_v
        const2d((D, D)), const2d((1, D)),                  # to_out
        const2d((2 * D, 2 * D)), const2d((1, 2 * D)),      # ffn[0] Linear
        const2d((1, 2 * D)), const2d((1, 2 * D)),          # LayerNorm gamma/beta
        const2d((2 * D, D)), const2d((1, D)),              # ffn[3] Linear
    ]
    out_specs = [
        pl.BlockSpec((1, N, D), lambda b: (b, 0, 0)),
        pl.BlockSpec((1, N, D), lambda b: (b, 0, 0)),
    ]

    kernel = functools.partial(_cross_block_kernel,
                               num_heads=num_heads, scale=scale)
    return pl.pallas_call(
        kernel,
        out_shape=(jax.ShapeDtypeStruct((B, N, D), x0.dtype),
                   jax.ShapeDtypeStruct((B, N, D), x1.dtype)),
        grid_spec=pltpu.PrefetchScalarGridSpec(
            num_scalar_prefetch=0,
            grid=(B,),
            in_specs=in_specs,
            out_specs=out_specs,
        ),
        compiler_params=pltpu.CompilerParams(
            dimension_semantics=("parallel",)),
    )(*args)


# ----------------------------------------------------------------------------
# Pure-JAX reference (mirrors the PyTorch forward, non-flash / mask=None path).
# ----------------------------------------------------------------------------
def cross_block_ref(x0, x1, p, num_heads):
    B, N, D = x0.shape
    dh = D // num_heads
    scale = float(dh) ** -0.5

    def linear(x, w, b):
        return jnp.einsum("bnd,od->bno", x, w) + b

    def split_heads(v):
        return v.reshape(B, -1, num_heads, dh).transpose(0, 2, 1, 3)

    qk0 = split_heads(linear(x0, p["w_qk"], p["b_qk"]))
    qk1 = split_heads(linear(x1, p["w_qk"], p["b_qk"]))
    v0 = split_heads(linear(x0, p["w_v"], p["b_v"]))
    v1 = split_heads(linear(x1, p["w_v"], p["b_v"]))

    qk0 = qk0 * scale ** 0.5
    qk1 = qk1 * scale ** 0.5
    sim = jnp.einsum("bhid,bhjd->bhij", qk0, qk1)
    attn01 = jax.nn.softmax(sim, axis=-1)
    attn10 = jax.nn.softmax(jnp.swapaxes(sim, -1, -2), axis=-1)
    m0 = jnp.einsum("bhij,bhjd->bhid", attn01, v1)
    m1 = jnp.einsum("bhij,bhjd->bhid", attn10, v0)

    def merge_heads(v):
        return v.transpose(0, 2, 1, 3).reshape(B, -1, D)

    m0 = linear(merge_heads(m0), p["w_out"], p["b_out"])
    m1 = linear(merge_heads(m1), p["w_out"], p["b_out"])

    def ffn(x, m):
        h = jnp.concatenate([x, m], axis=-1)
        z = linear(h, p["w_ffn1"], p["b_ffn1"])
        mu = z.mean(-1, keepdims=True)
        var = ((z - mu) ** 2).mean(-1, keepdims=True)
        z = (z - mu) / jnp.sqrt(var + _LN_EPS) * p["ln_gamma"] + p["ln_beta"]
        z = jax.nn.gelu(z, approximate=False)
        return linear(z, p["w_ffn2"], p["b_ffn2"])

    return x0 + ffn(x0, m0), x1 + ffn(x1, m1)


if __name__ == "__main__":
    B, N, D, H = 2, 8, 32, 2
    key = jax.random.PRNGKey(0)
    ks = jax.random.split(key, 16)

    x0 = jax.random.normal(ks[0], (B, N, D), jnp.float32)
    x1 = jax.random.normal(ks[1], (B, N, D), jnp.float32)

    def linear_init(kw, kb, out_f, in_f):
        bound = 1.0 / (in_f ** 0.5)
        w = jax.random.uniform(kw, (out_f, in_f), jnp.float32, -bound, bound)
        b = jax.random.uniform(kb, (out_f,), jnp.float32, -bound, bound)
        return w, b

    w_qk, b_qk = linear_init(ks[2], ks[3], D, D)
    w_v, b_v = linear_init(ks[4], ks[5], D, D)
    w_out, b_out = linear_init(ks[6], ks[7], D, D)
    w_ffn1, b_ffn1 = linear_init(ks[8], ks[9], 2 * D, 2 * D)
    ln_gamma = 1.0 + 0.1 * jax.random.normal(ks[10], (2 * D,), jnp.float32)
    ln_beta = 0.1 * jax.random.normal(ks[11], (2 * D,), jnp.float32)
    w_ffn2, b_ffn2 = linear_init(ks[12], ks[13], D, 2 * D)

    params = dict(w_qk=w_qk, b_qk=b_qk, w_v=w_v, b_v=b_v,
                  w_out=w_out, b_out=b_out,
                  w_ffn1=w_ffn1, b_ffn1=b_ffn1,
                  ln_gamma=ln_gamma, ln_beta=ln_beta,
                  w_ffn2=w_ffn2, b_ffn2=b_ffn2)

    y0, y1 = cross_block(x0, x1, params, H)
    jax.block_until_ready((y0, y1))

    r0, r1 = cross_block_ref(x0, x1, params, H)
    assert y0.shape == (B, N, D) and y1.shape == (B, N, D)
    assert jnp.allclose(y0, r0, atol=1e-4, rtol=1e-4), "x0 output mismatch"
    assert jnp.allclose(y1, r1, atol=1e-4, rtol=1e-4), "x1 output mismatch"

    print("KERNEL_OK")
</pallas_src>

<mosaic_0001>
module attributes {stable_mosaic.version = 11 : i64} {
  func.func @_cross_block_kernel(%arg0: i32, %arg1: memref<1x8x32xf32, #tpu.memory_space<vmem>>, %arg2: memref<1x8x32xf32, #tpu.memory_space<vmem>>, %arg3: memref<32x32xf32, #tpu.memory_space<vmem>>, %arg4: memref<1x32xf32, #tpu.memory_space<vmem>>, %arg5: memref<32x32xf32, #tpu.memory_space<vmem>>, %arg6: memref<1x32xf32, #tpu.memory_space<vmem>>, %arg7: memref<32x32xf32, #tpu.memory_space<vmem>>, %arg8: memref<1x32xf32, #tpu.memory_space<vmem>>, %arg9: memref<64x64xf32, #tpu.memory_space<vmem>>, %arg10: memref<1x64xf32, #tpu.memory_space<vmem>>, %arg11: memref<1x64xf32, #tpu.memory_space<vmem>>, %arg12: memref<1x64xf32, #tpu.memory_space<vmem>>, %arg13: memref<64x32xf32, #tpu.memory_space<vmem>>, %arg14: memref<1x32xf32, #tpu.memory_space<vmem>>, %arg15: memref<1x8x32xf32, #tpu.memory_space<vmem>>, %arg16: memref<1x8x32xf32, #tpu.memory_space<vmem>>) attributes {dimension_semantics = [#tpu.dimension_semantics<parallel>], iteration_bounds = array<i64: 2>, scalar_prefetch = 0 : i64, scratch_operands = 0 : i64, tpu.core_type = #tpu.core_type<tc>, window_params = [{transform_indices = @transform_0, window_bounds = array<i64: 1, 8, 32>}, {transform_indices = @transform_1, window_bounds = array<i64: 1, 8, 32>}, {pipeline_mode = #tpu.pipeline_mode<synchronous>, transform_indices = @transform_2, window_bounds = array<i64: 32, 32>}, {pipeline_mode = #tpu.pipeline_mode<synchronous>, transform_indices = @transform_3, window_bounds = array<i64: 1, 32>}, {pipeline_mode = #tpu.pipeline_mode<synchronous>, transform_indices = @transform_4, window_bounds = array<i64: 32, 32>}, {pipeline_mode = #tpu.pipeline_mode<synchronous>, transform_indices = @transform_5, window_bounds = array<i64: 1, 32>}, {pipeline_mode = #tpu.pipeline_mode<synchronous>, transform_indices = @transform_6, window_bounds = array<i64: 32, 32>}, {pipeline_mode = #tpu.pipeline_mode<synchronous>, transform_indices = @transform_7, window_bounds = array<i64: 1, 32>}, {pipeline_mode = #tpu.pipeline_mode<synchronous>, transform_indices = @transform_8, window_bounds = array<i64: 64, 64>}, {pipeline_mode = #tpu.pipeline_mode<synchronous>, transform_indices = @transform_9, window_bounds = array<i64: 1, 64>}, {pipeline_mode = #tpu.pipeline_mode<synchronous>, transform_indices = @transform_10, window_bounds = array<i64: 1, 64>}, {pipeline_mode = #tpu.pipeline_mode<synchronous>, transform_indices = @transform_11, window_bounds = array<i64: 1, 64>}, {pipeline_mode = #tpu.pipeline_mode<synchronous>, transform_indices = @transform_12, window_bounds = array<i64: 64, 32>}, {pipeline_mode = #tpu.pipeline_mode<synchronous>, transform_indices = @transform_13, window_bounds = array<i64: 1, 32>}, {transform_indices = @transform_14, window_bounds = array<i64: 1, 8, 32>}, {transform_indices = @transform_15, window_bounds = array<i64: 1, 8, 32>}]} {
    %c0 = arith.constant 0 : index
    %c0_0 = arith.constant 0 : index
    %c0_1 = arith.constant 0 : index
    %0 = vector.load %arg1[%c0, %c0_0, %c0_1] : memref<1x8x32xf32, #tpu.memory_space<vmem>>, vector<1x8x32xf32>
    %1 = vector.shape_cast %0 : vector<1x8x32xf32> to vector<8x32xf32>
    %c0_2 = arith.constant 0 : index
    %c0_3 = arith.constant 0 : index
    %c0_4 = arith.constant 0 : index
    %2 = vector.load %arg2[%c0_2, %c0_3, %c0_4] : memref<1x8x32xf32, #tpu.memory_space<vmem>>, vector<1x8x32xf32>
    %3 = vector.shape_cast %2 : vector<1x8x32xf32> to vector<8x32xf32>
    %c0_5 = arith.constant 0 : index
    %c0_6 = arith.constant 0 : index
    %4 = vector.load %arg3[%c0_5, %c0_6] : memref<32x32xf32, #tpu.memory_space<vmem>>, vector<32x32xf32>
    %c0_7 = arith.constant 0 : index
    %c0_8 = arith.constant 0 : index
    %5 = vector.load %arg5[%c0_7, %c0_8] : memref<32x32xf32, #tpu.memory_space<vmem>>, vector<32x32xf32>
    %c0_9 = arith.constant 0 : index
    %c0_10 = arith.constant 0 : index
    %6 = vector.load %arg7[%c0_9, %c0_10] : memref<32x32xf32, #tpu.memory_space<vmem>>, vector<32x32xf32>
    %c0_11 = arith.constant 0 : index
    %c0_12 = arith.constant 0 : index
    %7 = vector.load %arg4[%c0_11, %c0_12] : memref<1x32xf32, #tpu.memory_space<vmem>>, vector<1x32xf32>
    %c0_13 = arith.constant 0 : index
    %c0_14 = arith.constant 0 : index
    %8 = vector.load %arg6[%c0_13, %c0_14] : memref<1x32xf32, #tpu.memory_space<vmem>>, vector<1x32xf32>
    %c0_15 = arith.constant 0 : index
    %c0_16 = arith.constant 0 : index
    %9 = vector.load %arg8[%c0_15, %c0_16] : memref<1x32xf32, #tpu.memory_space<vmem>>, vector<1x32xf32>
    %cst = arith.constant dense<0.000000e+00> : vector<8x32xf32>
    %10 = tpu.matmul %1, %4, %cst {dimension_numbers = #tpu.dot_dimension_numbers<[1], [0], [0], [1], [0, 0, 1, 1], [], []>} : vector<8x32xf32>, vector<32x32xf32>, vector<8x32xf32> -> vector<8x32xf32>
    %11 = vector.broadcast %7 : vector<1x32xf32> to vector<8x32xf32>
    %12 = arith.addf %10, %11 : vector<8x32xf32>
    %cst_17 = arith.constant dense<0.000000e+00> : vector<8x32xf32>
    %13 = tpu.matmul %3, %4, %cst_17 {dimension_numbers = #tpu.dot_dimension_numbers<[1], [0], [0], [1], [0, 0, 1, 1], [], []>} : vector<8x32xf32>, vector<32x32xf32>, vector<8x32xf32> -> vector<8x32xf32>
    %14 = vector.broadcast %7 : vector<1x32xf32> to vector<8x32xf32>
    %15 = arith.addf %13, %14 : vector<8x32xf32>
    %cst_18 = arith.constant dense<0.000000e+00> : vector<8x32xf32>
    %16 = tpu.matmul %1, %5, %cst_18 {dimension_numbers = #tpu.dot_dimension_numbers<[1], [0], [0], [1], [0, 0, 1, 1], [], []>} : vector<8x32xf32>, vector<32x32xf32>, vector<8x32xf32> -> vector<8x32xf32>
    %17 = vector.broadcast %8 : vector<1x32xf32> to vector<8x32xf32>
    %18 = arith.addf %16, %17 : vector<8x32xf32>
    %cst_19 = arith.constant dense<0.000000e+00> : vector<8x32xf32>
    %19 = tpu.matmul %3, %5, %cst_19 {dimension_numbers = #tpu.dot_dimension_numbers<[1], [0], [0], [1], [0, 0, 1, 1], [], []>} : vector<8x32xf32>, vector<32x32xf32>, vector<8x32xf32> -> vector<8x32xf32>
    %20 = vector.broadcast %8 : vector<1x32xf32> to vector<8x32xf32>
    %21 = arith.addf %19, %20 : vector<8x32xf32>
    %cst_20 = arith.constant 0.000000e+00 : f32
    %22 = vector.broadcast %cst_20 : f32 to vector<8x32xf32>
    %cst_21 = arith.constant 0.000000e+00 : f32
    %23 = vector.broadcast %cst_21 : f32 to vector<8x32xf32>
    %24 = vector.extract_strided_slice %12 {offsets = [0, 0], sizes = [8, 16], strides = [1, 1]} : vector<8x32xf32> to vector<8x16xf32>
    %cst_22 = arith.constant 5.000000e-01 : f32
    %25 = vector.broadcast %cst_22 : f32 to vector<8x16xf32>
    %26 = arith.mulf %24, %25 : vector<8x16xf32>
    %27 = vector.extract_strided_slice %15 {offsets = [0, 0], sizes = [8, 16], strides = [1, 1]} : vector<8x32xf32> to vector<8x16xf32>
    %cst_23 = arith.constant 5.000000e-01 : f32
    %28 = vector.broadcast %cst_23 : f32 to vector<8x16xf32>
    %29 = arith.mulf %27, %28 : vector<8x16xf32>
    %30 = vector.extract_strided_slice %18 {offsets = [0, 0], sizes = [8, 16], strides = [1, 1]} : vector<8x32xf32> to vector<8x16xf32>
    %31 = vector.extract_strided_slice %21 {offsets = [0, 0], sizes = [8, 16], strides = [1, 1]} : vector<8x32xf32> to vector<8x16xf32>
    %32 = vector.extract_strided_slice %6 {offsets = [0, 0], sizes = [16, 32], strides = [1, 1]} : vector<32x32xf32> to vector<16x32xf32>
    %33 = tpu.transpose %29, [1, 0] : vector<8x16xf32> -> vector<16x8xf32>
    %cst_24 = arith.constant dense<0.000000e+00> : vector<8x8xf32>
    %34 = tpu.matmul %26, %33, %cst_24 {dimension_numbers = #tpu.dot_dimension_numbers<[1], [0], [0], [1], [0, 0, 1, 1], [], []>} : vector<8x16xf32>, vector<16x8xf32>, vector<8x8xf32> -> vector<8x8xf32>
    %cst_25 = arith.constant dense<0xFF800000> : vector<8xf32>
    %35 = vector.multi_reduction <maximumf>, %34, %cst_25 [1] : vector<8x8xf32> to vector<8xf32>
    %36 = vector.shape_cast %35 : vector<8xf32> to vector<8x1xf32>
    %37 = vector.broadcast %36 : vector<8x1xf32> to vector<8x8xf32>
    %38 = arith.subf %34, %37 : vector<8x8xf32>
    %39 = math.exp %38 : vector<8x8xf32>
    %cst_26 = arith.constant dense<0.000000e+00> : vector<8xf32>
    %40 = vector.multi_reduction <add>, %39, %cst_26 [1] : vector<8x8xf32> to vector<8xf32>
    %41 = vector.shape_cast %40 : vector<8xf32> to vector<8x1xf32>
    %42 = vector.broadcast %41 : vector<8x1xf32> to vector<8x8xf32>
    %43 = arith.divf %39, %42 : vector<8x8xf32>
    %44 = tpu.transpose %34, [1, 0] : vector<8x8xf32> -> vector<8x8xf32>
    %cst_27 = arith.constant dense<0xFF800000> : vector<8xf32>
    %45 = vector.multi_reduction <maximumf>, %44, %cst_27 [1] : vector<8x8xf32> to vector<8xf32>
    %46 = vector.shape_cast %45 : vector<8xf32> to vector<8x1xf32>
    %47 = vector.broadcast %46 : vector<8x1xf32> to vector<8x8xf32>
    %48 = arith.subf %44, %47 : vector<8x8xf32>
    %49 = math.exp %48 : vector<8x8xf32>
    %cst_28 = arith.constant dense<0.000000e+00> : vector<8xf32>
    %50 = vector.multi_reduction <add>, %49, %cst_28 [1] : vector<8x8xf32> to vector<8xf32>
    %51 = vector.shape_cast %50 : vector<8xf32> to vector<8x1xf32>
    %52 = vector.broadcast %51 : vector<8x1xf32> to vector<8x8xf32>
    %53 = arith.divf %49, %52 : vector<8x8xf32>
    %cst_29 = arith.constant dense<0.000000e+00> : vector<8x16xf32>
    %54 = tpu.matmul %43, %31, %cst_29 {dimension_numbers = #tpu.dot_dimension_numbers<[1], [0], [0], [1], [0, 0, 1, 1], [], []>} : vector<8x8xf32>, vector<8x16xf32>, vector<8x16xf32> -> vector<8x16xf32>
    %cst_30 = arith.constant dense<0.000000e+00> : vector<8x16xf32>
    %55 = tpu.matmul %53, %30, %cst_30 {dimension_numbers = #tpu.dot_dimension_numbers<[1], [0], [0], [1], [0, 0, 1, 1], [], []>} : vector<8x8xf32>, vector<8x16xf32>, vector<8x16xf32> -> vector<8x16xf32>
    %cst_31 = arith.constant dense<0.000000e+00> : vector<8x32xf32>
    %56 = tpu.matmul %54, %32, %cst_31 {dimension_numbers = #tpu.dot_dimension_numbers<[1], [0], [0], [1], [0, 0, 1, 1], [], []>} : vector<8x16xf32>, vector<16x32xf32>, vector<8x32xf32> -> vector<8x32xf32>
    %57 = arith.addf %22, %56 : vector<8x32xf32>
    %cst_32 = arith.constant dense<0.000000e+00> : vector<8x32xf32>
    %58 = tpu.matmul %55, %32, %cst_32 {dimension_numbers = #tpu.dot_dimension_numbers<[1], [0], [0], [1], [0, 0, 1, 1], [], []>} : vector<8x16xf32>, vector<16x32xf32>, vector<8x32xf32> -> vector<8x32xf32>
    %59 = arith.addf %23, %58 : vector<8x32xf32>
    %60 = vector.extract_strided_slice %12 {offsets = [0, 16], sizes = [8, 16], strides = [1, 1]} : vector<8x32xf32> to vector<8x16xf32>
    %cst_33 = arith.constant 5.000000e-01 : f32
    %61 = vector.broadcast %cst_33 : f32 to vector<8x16xf32>
    %62 = arith.mulf %60, %61 : vector<8x16xf32>
    %63 = vector.extract_strided_slice %15 {offsets = [0, 16], sizes = [8, 16], strides = [1, 1]} : vector<8x32xf32> to vector<8x16xf32>
    %cst_34 = arith.constant 5.000000e-01 : f32
    %64 = vector.broadcast %cst_34 : f32 to vector<8x16xf32>
    %65 = arith.mulf %63, %64 : vector<8x16xf32>
    %66 = vector.extract_strided_slice %18 {offsets = [0, 16], sizes = [8, 16], strides = [1, 1]} : vector<8x32xf32> to vector<8x16xf32>
    %67 = vector.extract_strided_slice %21 {offsets = [0, 16], sizes = [8, 16], strides = [1, 1]} : vector<8x32xf32> to vector<8x16xf32>
    %68 = vector.extract_strided_slice %6 {offsets = [16, 0], sizes = [16, 32], strides = [1, 1]} : vector<32x32xf32> to vector<16x32xf32>
    %69 = tpu.transpose %65, [1, 0] : vector<8x16xf32> -> vector<16x8xf32>
    %cst_35 = arith.constant dense<0.000000e+00> : vector<8x8xf32>
    %70 = tpu.matmul %62, %69, %cst_35 {dimension_numbers = #tpu.dot_dimension_numbers<[1], [0], [0], [1], [0, 0, 1, 1], [], []>} : vector<8x16xf32>, vector<16x8xf32>, vector<8x8xf32> -> vector<8x8xf32>
    %cst_36 = arith.constant dense<0xFF800000> : vector<8xf32>
    %71 = vector.multi_reduction <maximumf>, %70, %cst_36 [1] : vector<8x8xf32> to vector<8xf32>
    %72 = vector.shape_cast %71 : vector<8xf32> to vector<8x1xf32>
    %73 = vector.broadcast %72 : vector<8x1xf32> to vector<8x8xf32>
    %74 = arith.subf %70, %73 : vector<8x8xf32>
    %75 = math.exp %74 : vector<8x8xf32>
    %cst_37 = arith.constant dense<0.000000e+00> : vector<8xf32>
    %76 = vector.multi_reduction <add>, %75, %cst_37 [1] : vector<8x8xf32> to vector<8xf32>
    %77 = vector.shape_cast %76 : vector<8xf32> to vector<8x1xf32>
    %78 = vector.broadcast %77 : vector<8x1xf32> to vector<8x8xf32>
    %79 = arith.divf %75, %78 : vector<8x8xf32>
    %80 = tpu.transpose %70, [1, 0] : vector<8x8xf32> -> vector<8x8xf32>
    %cst_38 = arith.constant dense<0xFF800000> : vector<8xf32>
    %81 = vector.multi_reduction <maximumf>, %80, %cst_38 [1] : vector<8x8xf32> to vector<8xf32>
    %82 = vector.shape_cast %81 : vector<8xf32> to vector<8x1xf32>
    %83 = vector.broadcast %82 : vector<8x1xf32> to vector<8x8xf32>
    %84 = arith.subf %80, %83 : vector<8x8xf32>
    %85 = math.exp %84 : vector<8x8xf32>
    %cst_39 = arith.constant dense<0.000000e+00> : vector<8xf32>
    %86 = vector.multi_reduction <add>, %85, %cst_39 [1] : vector<8x8xf32> to vector<8xf32>
    %87 = vector.shape_cast %86 : vector<8xf32> to vector<8x1xf32>
    %88 = vector.broadcast %87 : vector<8x1xf32> to vector<8x8xf32>
    %89 = arith.divf %85, %88 : vector<8x8xf32>
    %cst_40 = arith.constant dense<0.000000e+00> : vector<8x16xf32>
    %90 = tpu.matmul %79, %67, %cst_40 {dimension_numbers = #tpu.dot_dimension_numbers<[1], [0], [0], [1], [0, 0, 1, 1], [], []>} : vector<8x8xf32>, vector<8x16xf32>, vector<8x16xf32> -> vector<8x16xf32>
    %cst_41 = arith.constant dense<0.000000e+00> : vector<8x16xf32>
    %91 = tpu.matmul %89, %66, %cst_41 {dimension_numbers = #tpu.dot_dimension_numbers<[1], [0], [0], [1], [0, 0, 1, 1], [], []>} : vector<8x8xf32>, vector<8x16xf32>, vector<8x16xf32> -> vector<8x16xf32>
    %cst_42 = arith.constant dense<0.000000e+00> : vector<8x32xf32>
    %92 = tpu.matmul %90, %68, %cst_42 {dimension_numbers = #tpu.dot_dimension_numbers<[1], [0], [0], [1], [0, 0, 1, 1], [], []>} : vector<8x16xf32>, vector<16x32xf32>, vector<8x32xf32> -> vector<8x32xf32>
    %93 = arith.addf %57, %92 : vector<8x32xf32>
    %cst_43 = arith.constant dense<0.000000e+00> : vector<8x32xf32>
    %94 = tpu.matmul %91, %68, %cst_43 {dimension_numbers = #tpu.dot_dimension_numbers<[1], [0], [0], [1], [0, 0, 1, 1], [], []>} : vector<8x16xf32>, vector<16x32xf32>, vector<8x32xf32> -> vector<8x32xf32>
    %95 = arith.addf %59, %94 : vector<8x32xf32>
    %96 = vector.broadcast %9 : vector<1x32xf32> to vector<8x32xf32>
    %97 = arith.addf %93, %96 : vector<8x32xf32>
    %98 = vector.broadcast %9 : vector<1x32xf32> to vector<8x32xf32>
    %99 = arith.addf %95, %98 : vector<8x32xf32>
    %c0_44 = arith.constant 0 : index
    %c0_45 = arith.constant 0 : index
    %100 = vector.load %arg9[%c0_44, %c0_45] : memref<64x64xf32, #tpu.memory_space<vmem>>, vector<64x64xf32>
    %c0_46 = arith.constant 0 : index
    %c0_47 = arith.constant 0 : index
    %101 = vector.load %arg10[%c0_46, %c0_47] : memref<1x64xf32, #tpu.memory_space<vmem>>, vector<1x64xf32>
    %c0_48 = arith.constant 0 : index
    %c0_49 = arith.constant 0 : index
    %102 = vector.load %arg11[%c0_48, %c0_49] : memref<1x64xf32, #tpu.memory_space<vmem>>, vector<1x64xf32>
    %c0_50 = arith.constant 0 : index
    %c0_51 = arith.constant 0 : index
    %103 = vector.load %arg12[%c0_50, %c0_51] : memref<1x64xf32, #tpu.memory_space<vmem>>, vector<1x64xf32>
    %c0_52 = arith.constant 0 : index
    %c0_53 = arith.constant 0 : index
    %104 = vector.load %arg13[%c0_52, %c0_53] : memref<64x32xf32, #tpu.memory_space<vmem>>, vector<64x32xf32>
    %c0_54 = arith.constant 0 : index
    %c0_55 = arith.constant 0 : index
    %105 = vector.load %arg14[%c0_54, %c0_55] : memref<1x32xf32, #tpu.memory_space<vmem>>, vector<1x32xf32>
    %106 = vector.extract_strided_slice %100 {offsets = [0, 0], sizes = [32, 64], strides = [1, 1]} : vector<64x64xf32> to vector<32x64xf32>
    %107 = vector.extract_strided_slice %100 {offsets = [32, 0], sizes = [32, 64], strides = [1, 1]} : vector<64x64xf32> to vector<32x64xf32>
    %cst_56 = arith.constant dense<0.000000e+00> : vector<8x64xf32>
    %108 = tpu.matmul %1, %106, %cst_56 {dimension_numbers = #tpu.dot_dimension_numbers<[1], [0], [0], [1], [0, 0, 1, 1], [], []>} : vector<8x32xf32>, vector<32x64xf32>, vector<8x64xf32> -> vector<8x64xf32>
    %cst_57 = arith.constant dense<0.000000e+00> : vector<8x64xf32>
    %109 = tpu.matmul %97, %107, %cst_57 {dimension_numbers = #tpu.dot_dimension_numbers<[1], [0], [0], [1], [0, 0, 1, 1], [], []>} : vector<8x32xf32>, vector<32x64xf32>, vector<8x64xf32> -> vector<8x64xf32>
    %110 = arith.addf %108, %109 : vector<8x64xf32>
    %111 = vector.broadcast %101 : vector<1x64xf32> to vector<8x64xf32>
    %112 = arith.addf %110, %111 : vector<8x64xf32>
    %cst_58 = arith.constant dense<0.000000e+00> : vector<8xf32>
    %113 = vector.multi_reduction <add>, %112, %cst_58 [1] : vector<8x64xf32> to vector<8xf32>
    %114 = vector.shape_cast %113 : vector<8xf32> to vector<8x1xf32>
    %cst_59 = arith.constant 6.400000e+01 : f32
    %115 = vector.broadcast %cst_59 : f32 to vector<8x1xf32>
    %116 = arith.divf %114, %115 : vector<8x1xf32>
    %117 = vector.broadcast %116 : vector<8x1xf32> to vector<8x64xf32>
    %118 = arith.subf %112, %117 : vector<8x64xf32>
    %119 = arith.mulf %118, %118 : vector<8x64xf32>
    %cst_60 = arith.constant dense<0.000000e+00> : vector<8xf32>
    %120 = vector.multi_reduction <add>, %119, %cst_60 [1] : vector<8x64xf32> to vector<8xf32>
    %121 = vector.shape_cast %120 : vector<8xf32> to vector<8x1xf32>
    %cst_61 = arith.constant 6.400000e+01 : f32
    %122 = vector.broadcast %cst_61 : f32 to vector<8x1xf32>
    %123 = arith.divf %121, %122 : vector<8x1xf32>
    %124 = vector.broadcast %116 : vector<8x1xf32> to vector<8x64xf32>
    %125 = arith.subf %112, %124 : vector<8x64xf32>
    %cst_62 = arith.constant 9.99999974E-6 : f32
    %126 = vector.broadcast %cst_62 : f32 to vector<8x1xf32>
    %127 = arith.addf %123, %126 : vector<8x1xf32>
    %128 = math.rsqrt %127 : vector<8x1xf32>
    %129 = vector.broadcast %128 : vector<8x1xf32> to vector<8x64xf32>
    %130 = arith.mulf %125, %129 : vector<8x64xf32>
    %131 = vector.broadcast %102 : vector<1x64xf32> to vector<8x64xf32>
    %132 = arith.mulf %130, %131 : vector<8x64xf32>
    %133 = vector.broadcast %103 : vector<1x64xf32> to vector<8x64xf32>
    %134 = arith.addf %132, %133 : vector<8x64xf32>
    %cst_63 = arith.constant 5.000000e-01 : f32
    %135 = vector.broadcast %cst_63 : f32 to vector<8x64xf32>
    %136 = arith.mulf %135, %134 : vector<8x64xf32>
    %cst_64 = arith.constant 0.707106769 : f32
    %137 = vector.broadcast %cst_64 : f32 to vector<8x64xf32>
    %138 = arith.mulf %134, %137 : vector<8x64xf32>
    %139 = math.absf %138 : vector<8x64xf32>
    %cst_65 = arith.constant 0.327591091 : f32
    %140 = vector.broadcast %cst_65 : f32 to vector<8x64xf32>
    %141 = arith.mulf %140, %139 : vector<8x64xf32>
    %cst_66 = arith.constant 1.000000e+00 : f32
    %142 = vector.broadcast %cst_66 : f32 to vector<8x64xf32>
    %143 = arith.addf %142, %141 : vector<8x64xf32>
    %cst_67 = arith.constant 1.000000e+00 : f32
    %144 = vector.broadcast %cst_67 : f32 to vector<8x64xf32>
    %145 = arith.divf %144, %143 : vector<8x64xf32>
    %cst_68 = arith.constant 1.06140542 : f32
    %146 = vector.broadcast %cst_68 : f32 to vector<8x64xf32>
    %147 = arith.mulf %145, %146 : vector<8x64xf32>
    %cst_69 = arith.constant -1.45315206 : f32
    %148 = vector.broadcast %cst_69 : f32 to vector<8x64xf32>
    %149 = arith.addf %148, %147 : vector<8x64xf32>
    %150 = arith.mulf %145, %149 : vector<8x64xf32>
    %cst_70 = arith.constant 1.42141378 : f32
    %151 = vector.broadcast %cst_70 : f32 to vector<8x64xf32>
    %152 = arith.addf %151, %150 : vector<8x64xf32>
    %153 = arith.mulf %145, %152 : vector<8x64xf32>
    %cst_71 = arith.constant -0.284496725 : f32
    %154 = vector.broadcast %cst_71 : f32 to vector<8x64xf32>
    %155 = arith.addf %154, %153 : vector<8x64xf32>
    %156 = arith.mulf %145, %155 : vector<8x64xf32>
    %cst_72 = arith.constant 0.254829586 : f32
    %157 = vector.broadcast %cst_72 : f32 to vector<8x64xf32>
    %158 = arith.addf %157, %156 : vector<8x64xf32>
    %159 = arith.mulf %145, %158 : vector<8x64xf32>
    %cst_73 = arith.constant 0.000000e+00 : f32
    %160 = vector.broadcast %cst_73 : f32 to vector<8x64xf32>
    %161 = arith.subf %160, %139 : vector<8x64xf32>
    %162 = arith.mulf %161, %139 : vector<8x64xf32>
    %163 = math.exp %162 : vector<8x64xf32>
    %164 = arith.mulf %159, %163 : vector<8x64xf32>
    %cst_74 = arith.constant 1.000000e+00 : f32
    %165 = vector.broadcast %cst_74 : f32 to vector<8x64xf32>
    %166 = arith.subf %165, %164 : vector<8x64xf32>
    %cst_75 = arith.constant 0.000000e+00 : f32
    %167 = vector.broadcast %cst_75 : f32 to vector<8x64xf32>
    %168 = arith.cmpf oge, %138, %167 : vector<8x64xf32>
    %cst_76 = arith.constant 0.000000e+00 : f32
    %169 = vector.broadcast %cst_76 : f32 to vector<8x64xf32>
    %170 = arith.subf %169, %166 : vector<8x64xf32>
    %171 = arith.select %168, %166, %170 : vector<8x64xi1>, vector<8x64xf32>
    %cst_77 = arith.constant 1.000000e+00 : f32
    %172 = vector.broadcast %cst_77 : f32 to vector<8x64xf32>
    %173 = arith.addf %172, %171 : vector<8x64xf32>
    %174 = arith.mulf %136, %173 : vector<8x64xf32>
    %cst_78 = arith.constant dense<0.000000e+00> : vector<8x32xf32>
    %175 = tpu.matmul %174, %104, %cst_78 {dimension_numbers = #tpu.dot_dimension_numbers<[1], [0], [0], [1], [0, 0, 1, 1], [], []>} : vector<8x64xf32>, vector<64x32xf32>, vector<8x32xf32> -> vector<8x32xf32>
    %176 = arith.addf %1, %175 : vector<8x32xf32>
    %177 = vector.broadcast %105 : vector<1x32xf32> to vector<8x32xf32>
    %178 = arith.addf %176, %177 : vector<8x32xf32>
    %c0_79 = arith.constant 0 : index
    %c0_80 = arith.constant 0 : index
    %c0_81 = arith.constant 0 : index
    %179 = vector.load %arg15[%c0_79, %c0_80, %c0_81] : memref<1x8x32xf32, #tpu.memory_space<vmem>>, vector<1x8x32xf32>
    %180 = vector.shape_cast %179 : vector<1x8x32xf32> to vector<8x32xf32>
    %181 = vector.shape_cast %178 : vector<8x32xf32> to vector<1x8x32xf32>
    tpu.vector_store %arg15[%c0_79, %c0_80, %c0_81], %181 {strides = array<i32>} : memref<1x8x32xf32, #tpu.memory_space<vmem>>, vector<1x8x32xf32>,
    %cst_82 = arith.constant dense<0.000000e+00> : vector<8x64xf32>
    %182 = tpu.matmul %3, %106, %cst_82 {dimension_numbers = #tpu.dot_dimension_numbers<[1], [0], [0], [1], [0, 0, 1, 1], [], []>} : vector<8x32xf32>, vector<32x64xf32>, vector<8x64xf32> -> vector<8x64xf32>
    %cst_83 = arith.constant dense<0.000000e+00> : vector<8x64xf32>
    %183 = tpu.matmul %99, %107, %cst_83 {dimension_numbers = #tpu.dot_dimension_numbers<[1], [0], [0], [1], [0, 0, 1, 1], [], []>} : vector<8x32xf32>, vector<32x64xf32>, vector<8x64xf32> -> vector<8x64xf32>
    %184 = arith.addf %182, %183 : vector<8x64xf32>
    %185 = vector.broadcast %101 : vector<1x64xf32> to vector<8x64xf32>
    %186 = arith.addf %184, %185 : vector<8x64xf32>
    %cst_84 = arith.constant dense<0.000000e+00> : vector<8xf32>
    %187 = vector.multi_reduction <add>, %186, %cst_84 [1] : vector<8x64xf32> to vector<8xf32>
    %188 = vector.shape_cast %187 : vector<8xf32> to vector<8x1xf32>
    %cst_85 = arith.constant 6.400000e+01 : f32
    %189 = vector.broadcast %cst_85 : f32 to vector<8x1xf32>
    %190 = arith.divf %188, %189 : vector<8x1xf32>
    %191 = vector.broadcast %190 : vector<8x1xf32> to vector<8x64xf32>
    %192 = arith.subf %186, %191 : vector<8x64xf32>
    %193 = arith.mulf %192, %192 : vector<8x64xf32>
    %cst_86 = arith.constant dense<0.000000e+00> : vector<8xf32>
    %194 = vector.multi_reduction <add>, %193, %cst_86 [1] : vector<8x64xf32> to vector<8xf32>
    %195 = vector.shape_cast %194 : vector<8xf32> to vector<8x1xf32>
    %cst_87 = arith.constant 6.400000e+01 : f32
    %196 = vector.broadcast %cst_87 : f32 to vector<8x1xf32>
    %197 = arith.divf %195, %196 : vector<8x1xf32>
    %198 = vector.broadcast %190 : vector<8x1xf32> to vector<8x64xf32>
    %199 = arith.subf %186, %198 : vector<8x64xf32>
    %cst_88 = arith.constant 9.99999974E-6 : f32
    %200 = vector.broadcast %cst_88 : f32 to vector<8x1xf32>
    %201 = arith.addf %197, %200 : vector<8x1xf32>
    %202 = math.rsqrt %201 : vector<8x1xf32>
    %203 = vector.broadcast %202 : vector<8x1xf32> to vector<8x64xf32>
    %204 = arith.mulf %199, %203 : vector<8x64xf32>
    %205 = vector.broadcast %102 : vector<1x64xf32> to vector<8x64xf32>
    %206 = arith.mulf %204, %205 : vector<8x64xf32>
    %207 = vector.broadcast %103 : vector<1x64xf32> to vector<8x64xf32>
    %208 = arith.addf %206, %207 : vector<8x64xf32>
    %cst_89 = arith.constant 5.000000e-01 : f32
    %209 = vector.broadcast %cst_89 : f32 to vector<8x64xf32>
    %210 = arith.mulf %209, %208 : vector<8x64xf32>
    %cst_90 = arith.constant 0.707106769 : f32
    %211 = vector.broadcast %cst_90 : f32 to vector<8x64xf32>
    %212 = arith.mulf %208, %211 : vector<8x64xf32>
    %213 = math.absf %212 : vector<8x64xf32>
    %cst_91 = arith.constant 0.327591091 : f32
    %214 = vector.broadcast %cst_91 : f32 to vector<8x64xf32>
    %215 = arith.mulf %214, %213 : vector<8x64xf32>
    %cst_92 = arith.constant 1.000000e+00 : f32
    %216 = vector.broadcast %cst_92 : f32 to vector<8x64xf32>
    %217 = arith.addf %216, %215 : vector<8x64xf32>
    %cst_93 = arith.constant 1.000000e+00 : f32
    %218 = vector.broadcast %cst_93 : f32 to vector<8x64xf32>
    %219 = arith.divf %218, %217 : vector<8x64xf32>
    %cst_94 = arith.constant 1.06140542 : f32
    %220 = vector.broadcast %cst_94 : f32 to vector<8x64xf32>
    %221 = arith.mulf %219, %220 : vector<8x64xf32>
    %cst_95 = arith.constant -1.45315206 : f32
    %222 = vector.broadcast %cst_95 : f32 to vector<8x64xf32>
    %223 = arith.addf %222, %221 : vector<8x64xf32>
    %224 = arith.mulf %219, %223 : vector<8x64xf32>
    %cst_96 = arith.constant 1.42141378 : f32
    %225 = vector.broadcast %cst_96 : f32 to vector<8x64xf32>
    %226 = arith.addf %225, %224 : vector<8x64xf32>
    %227 = arith.mulf %219, %226 : vector<8x64xf32>
    %cst_97 = arith.constant -0.284496725 : f32
    %228 = vector.broadcast %cst_97 : f32 to vector<8x64xf32>
    %229 = arith.addf %228, %227 : vector<8x64xf32>
    %230 = arith.mulf %219, %229 : vector<8x64xf32>
    %cst_98 = arith.constant 0.254829586 : f32
    %231 = vector.broadcast %cst_98 : f32 to vector<8x64xf32>
    %232 = arith.addf %231, %230 : vector<8x64xf32>
    %233 = arith.mulf %219, %232 : vector<8x64xf32>
    %cst_99 = arith.constant 0.000000e+00 : f32
    %234 = vector.broadcast %cst_99 : f32 to vector<8x64xf32>
    %235 = arith.subf %234, %213 : vector<8x64xf32>
    %236 = arith.mulf %235, %213 : vector<8x64xf32>
    %237 = math.exp %236 : vector<8x64xf32>
    %238 = arith.mulf %233, %237 : vector<8x64xf32>
    %cst_100 = arith.constant 1.000000e+00 : f32
    %239 = vector.broadcast %cst_100 : f32 to vector<8x64xf32>
    %240 = arith.subf %239, %238 : vector<8x64xf32>
    %cst_101 = arith.constant 0.000000e+00 : f32
    %241 = vector.broadcast %cst_101 : f32 to vector<8x64xf32>
    %242 = arith.cmpf oge, %212, %241 : vector<8x64xf32>
    %cst_102 = arith.constant 0.000000e+00 : f32
    %243 = vector.broadcast %cst_102 : f32 to vector<8x64xf32>
    %244 = arith.subf %243, %240 : vector<8x64xf32>
    %245 = arith.select %242, %240, %244 : vector<8x64xi1>, vector<8x64xf32>
    %cst_103 = arith.constant 1.000000e+00 : f32
    %246 = vector.broadcast %cst_103 : f32 to vector<8x64xf32>
    %247 = arith.addf %246, %245 : vector<8x64xf32>
    %248 = arith.mulf %210, %247 : vector<8x64xf32>
    %cst_104 = arith.constant dense<0.000000e+00> : vector<8x32xf32>
    %249 = tpu.matmul %248, %104, %cst_104 {dimension_numbers = #tpu.dot_dimension_numbers<[1], [0], [0], [1], [0, 0, 1, 1], [], []>} : vector<8x64xf32>, vector<64x32xf32>, vector<8x32xf32> -> vector<8x32xf32>
    %250 = arith.addf %3, %249 : vector<8x32xf32>
    %251 = vector.broadcast %105 : vector<1x32xf32> to vector<8x32xf32>
    %252 = arith.addf %250, %251 : vector<8x32xf32>
    %c0_105 = arith.constant 0 : index
    %c0_106 = arith.constant 0 : index
    %c0_107 = arith.constant 0 : index
    %253 = vector.load %arg16[%c0_105, %c0_106, %c0_107] : memref<1x8x32xf32, #tpu.memory_space<vmem>>, vector<1x8x32xf32>
    %254 = vector.shape_cast %253 : vector<1x8x32xf32> to vector<8x32xf32>
    %255 = vector.shape_cast %252 : vector<8x32xf32> to vector<1x8x32xf32>
    tpu.vector_store %arg16[%c0_105, %c0_106, %c0_107], %255 {strides = array<i32>} : memref<1x8x32xf32, #tpu.memory_space<vmem>>, vector<1x8x32xf32>,
    return
  }
  func.func @transform_0(%arg0: i32) -> (i32, i32, i32) {
    %c0_i32 = arith.constant 0 : i32
    %c0_i32_0 = arith.constant 0 : i32
    %c0_i32_1 = arith.constant 0 : i32
    return %arg0, %c0_i32, %c0_i32_0 : i32, i32, i32
  }
  func.func @transform_1(%arg0: i32) -> (i32, i32, i32) {
    %c0_i32 = arith.constant 0 : i32
    %c0_i32_0 = arith.constant 0 : i32
    %c0_i32_1 = arith.constant 0 : i32
    return %arg0, %c0_i32, %c0_i32_0 : i32, i32, i32
  }
  func.func @transform_2(%arg0: i32) -> (i32, i32) {
    %c0_i32 = arith.constant 0 : i32
    %c0_i32_0 = arith.constant 0 : i32
    %c0_i32_1 = arith.constant 0 : i32
    return %c0_i32, %c0_i32_0 : i32, i32
  }
  func.func @transform_3(%arg0: i32) -> (i32, i32) {
    %c0_i32 = arith.constant 0 : i32
    %c0_i32_0 = arith.constant 0 : i32
    %c0_i32_1 = arith.constant 0 : i32
    return %c0_i32, %c0_i32_0 : i32, i32
  }
  func.func @transform_4(%arg0: i32) -> (i32, i32) {
    %c0_i32 = arith.constant 0 : i32
    %c0_i32_0 = arith.constant 0 : i32
    %c0_i32_1 = arith.constant 0 : i32
    return %c0_i32, %c0_i32_0 : i32, i32
  }
  func.func @transform_5(%arg0: i32) -> (i32, i32) {
    %c0_i32 = arith.constant 0 : i32
    %c0_i32_0 = arith.constant 0 : i32
    %c0_i32_1 = arith.constant 0 : i32
    return %c0_i32, %c0_i32_0 : i32, i32
  }
  func.func @transform_6(%arg0: i32) -> (i32, i32) {
    %c0_i32 = arith.constant 0 : i32
    %c0_i32_0 = arith.constant 0 : i32
    %c0_i32_1 = arith.constant 0 : i32
    return %c0_i32, %c0_i32_0 : i32, i32
  }
  func.func @transform_7(%arg0: i32) -> (i32, i32) {
    %c0_i32 = arith.constant 0 : i32
    %c0_i32_0 = arith.constant 0 : i32
    %c0_i32_1 = arith.constant 0 : i32
    return %c0_i32, %c0_i32_0 : i32, i32
  }
  func.func @transform_8(%arg0: i32) -> (i32, i32) {
    %c0_i32 = arith.constant 0 : i32
    %c0_i32_0 = arith.constant 0 : i32
    %c0_i32_1 = arith.constant 0 : i32
    return %c0_i32, %c0_i32_0 : i32, i32
  }
  func.func @transform_9(%arg0: i32) -> (i32, i32) {
    %c0_i32 = arith.constant 0 : i32
    %c0_i32_0 = arith.constant 0 : i32
    %c0_i32_1 = arith.constant 0 : i32
    return %c0_i32, %c0_i32_0 : i32, i32
  }
  func.func @transform_10(%arg0: i32) -> (i32, i32) {
    %c0_i32 = arith.constant 0 : i32
    %c0_i32_0 = arith.constant 0 : i32
    %c0_i32_1 = arith.constant 0 : i32
    return %c0_i32, %c0_i32_0 : i32, i32
  }
  func.func @transform_11(%arg0: i32) -> (i32, i32) {
    %c0_i32 = arith.constant 0 : i32
    %c0_i32_0 = arith.constant 0 : i32
    %c0_i32_1 = arith.constant 0 : i32
    return %c0_i32, %c0_i32_0 : i32, i32
  }
  func.func @transform_12(%arg0: i32) -> (i32, i32) {
    %c0_i32 = arith.constant 0 : i32
    %c0_i32_0 = arith.constant 0 : i32
    %c0_i32_1 = arith.constant 0 : i32
    return %c0_i32, %c0_i32_0 : i32, i32
  }
  func.func @transform_13(%arg0: i32) -> (i32, i32) {
    %c0_i32 = arith.constant 0 : i32
    %c0_i32_0 = arith.constant 0 : i32
    %c0_i32_1 = arith.constant 0 : i32
    return %c0_i32, %c0_i32_0 : i32, i32
  }
  func.func @transform_14(%arg0: i32) -> (i32, i32, i32) {
    %c0_i32 = arith.constant 0 : i32
    %c0_i32_0 = arith.constant 0 : i32
    %c0_i32_1 = arith.constant 0 : i32
    return %arg0, %c0_i32, %c0_i32_0 : i32, i32, i32
  }
  func.func @transform_15(%arg0: i32) -> (i32, i32, i32) {
    %c0_i32 = arith.constant 0 : i32
    %c0_i32_0 = arith.constant 0 : i32
    %c0_i32_1 = arith.constant 0 : i32
    return %arg0, %c0_i32, %c0_i32_0 : i32, i32, i32
  }
}

</mosaic_0001>

<llo_original>
// kernel: tpu_custom_call.1
$region0: #{tpu_custom_call.1}
  #allocation0 [shape = 'u32[]', space=smem, size = 0x4, offset = 0x4, fixed_abs, tag = 'smem constant byte address 0x4 - core index']
  #allocation1 [shape = 'u32[144,128]{1,0:T(1,128)}', space=vmem, size = 0x12000, scoped, tag = 'internal scratch']
  %s0 = inlined_call_operand.hbm [shape: f32[2,8,32], index: 0, kind: input, shape index: {}]
  %s1 = inlined_call_operand.hbm [shape: f32[2,8,32], index: 1, kind: input, shape index: {}]
  %s2 = inlined_call_operand.vmem [shape: f32[32,32], index: 2, kind: input, shape index: {}]
  %s3 = inlined_call_operand.vmem [shape: f32[1,32], index: 3, kind: input, shape index: {}]
  %s4 = inlined_call_operand.hbm [shape: f32[32,32], index: 4, kind: input, shape index: {}]
  %s5 = inlined_call_operand.vmem [shape: f32[1,32], index: 5, kind: input, shape index: {}]
  %s6 = inlined_call_operand.hbm [shape: f32[32,32], index: 6, kind: input, shape index: {}]
  %s7 = inlined_call_operand.vmem [shape: f32[1,32], index: 7, kind: input, shape index: {}]
  %s8 = inlined_call_operand.vmem [shape: f32[64,64], index: 8, kind: input, shape index: {}]
  %s9 = inlined_call_operand.vmem [shape: f32[1,64], index: 9, kind: input, shape index: {}]
  %s10 = inlined_call_operand.vmem [shape: f32[1,64], index: 10, kind: input, shape index: {}]
  %s11 = inlined_call_operand.vmem [shape: f32[1,64], index: 11, kind: input, shape index: {}]
  %s12 = inlined_call_operand.vmem [shape: f32[64,32], index: 12, kind: input, shape index: {}]
  %s13 = inlined_call_operand.vmem [shape: f32[1,32], index: 13, kind: input, shape index: {}]
  %s14 = inlined_call_operand.hbm [shape: f32[2,8,32], index: 14, kind: output, shape index: {0}]
  %s15 = inlined_call_operand.hbm [shape: f32[2,8,32], index: 15, kind: output, shape index: {1}]
  %16 = xla_tuple %s14, %s15
  %s17 = sld [smem:[#allocation0]]
  $region113: #{tpu_custom_call.1} parent=0
    _
  %s19 = ssub.s32 1, %s17
  %s20 = scalar_select 0, %s19, %s17
  $region1: #{tpu_custom_call.1} parent=0
    #allocation2 [shape = 'u8[8192]{0}', space=vmem, size = 0x2000, scoped, tag = 'input window, operand 0']
    #allocation3 [shape = 's32[2]{0}', space=sflag, size = 0x8, scoped, tag = 'scoped memory for tpu_custom_call.1']
    #allocation4 [shape = 's32[2]{0}', space=sflag, size = 0x8, scoped, tag = 'scoped memory for tpu_custom_call.1']
    #allocation5 [shape = 'u8[8192]{0}', space=vmem, size = 0x2000, scoped, tag = 'input window, operand 1']
    #allocation6 [shape = 's32[2]{0}', space=sflag, size = 0x8, scoped, tag = 'scoped memory for tpu_custom_call.1']
    #allocation7 [shape = 'u8[16384]{0}', space=vmem, size = 0x4000, scoped, tag = 'input window, operand 4, single buffered']
    #allocation8 [shape = 'u8[16384]{0}', space=vmem, size = 0x4000, scoped, tag = 'input window, operand 6, single buffered']
    #allocation9 [shape = 's32[1]{0}', space=sflag, size = 0x4, scoped, tag = 'scoped memory for tpu_custom_call.1']
    #allocation10 [shape = 'u8[8192]{0}', space=vmem, size = 0x2000, scoped, tag = 'output window, operand 0']
    #allocation11 [shape = 'u8[8192]{0}', space=vmem, size = 0x2000, scoped, tag = 'output window, operand 1']
    #allocation12 [shape = 's32[2]{0}', space=sflag, size = 0x8, scoped, tag = 'scoped memory for tpu_custom_call.1']
    %21 = vsyncpa [#allocation3], 0
    %s22 = scalar_lea.sflag [#allocation3], 1
    %23 = vsyncpa %s22, 0
    %24 = vsyncpa [#allocation6], 0
    %s25 = scalar_lea.sflag [#allocation6], 1
    %26 = vsyncpa %s25, 0
    %27 = vsyncpa [#allocation9], 0
    %28 = vsyncpa [#allocation4], 0
    %s29 = scalar_lea.sflag [#allocation4], 1
    %30 = vsyncpa %s29, 0
    %31 = vsyncpa [#allocation12], 0
    %s32 = scalar_lea.sflag [#allocation12], 1
    %33 = vsyncpa %s32, 0
    loop: start=0, step=1, limit=4
    $region2: #{tpu_custom_call.1} parent=1 // loop_pre_header
      _
    $region3: #{tpu_custom_call.1} parent=1 // loop_header
      %s35 = sphi 0, %s39
      %p36 = scmp.ge.s32.totalorder %s35, 4
      %s45 = sphi 0, %s47
      %s48 = sphi 0, %s45
      %s49 = sphi 0, %s48
      %s65 = sphi 0, %s49
      %s71 = sphi 0, %s73
      %s74 = sphi 0, %s71
      %s75 = sphi 0, %s74
      %s91 = sphi 0, %s75
      %s95 = sphi 0, %s95
      %s97 = sphi 0, %s95
      %s98 = sphi 0, %s97
      %s112 = sphi 0, %s98
      %s116 = sphi 0, %s116
      %s118 = sphi 0, %s116
      %s119 = sphi 0, %s118
      %s133 = sphi 0, %s119
      %s137 = sphi 0, %s137
      %s139 = sphi 0, %s137
      %s140 = sphi 0, %s139
      %s154 = sphi 0, %s140
      %s158 = sphi 0, %s158
      %s160 = sphi 0, %s158
      %s161 = sphi 0, %s160
      %s175 = sphi 0, %s161
      %s179 = sphi 0, %s179
      %s181 = sphi 0, %s179
      %s182 = sphi 0, %s181
      %s196 = sphi 0, %s182
      %s200 = sphi 0, %s200
      %s202 = sphi 0, %s200
      %s203 = sphi 0, %s202
      %s217 = sphi 0, %s203
      %s221 = sphi 0, %s221
      %s223 = sphi 0, %s221
      %s224 = sphi 0, %s223
      %s238 = sphi 0, %s224
      %s242 = sphi 0, %s242
      %s244 = sphi 0, %s242
      %s245 = sphi 0, %s244
      %s259 = sphi 0, %s245
      %s263 = sphi 0, %s263
      %s265 = sphi 0, %s263
      %s266 = sphi 0, %s265
      %s280 = sphi 0, %s266
      %s284 = sphi 0, %s284
      %s286 = sphi 0, %s284
      %s287 = sphi 0, %s286
      %s301 = sphi 0, %s287
      %s305 = sphi 0, %s305
      %s307 = sphi 0, %s305
      %s308 = sphi 0, %s307
      %s322 = sphi 0, %s308
      %s326 = sphi 0, %s326
      %s328 = sphi 0, %s326
      %s329 = sphi 0, %s328
      %s343 = sphi 0, %s329
      %s349 = sphi 0, %s351
      %s352 = sphi 0, %s349
      %s353 = sphi 0, %s352
      %s369 = sphi 0, %s353
      %s375 = sphi 0, %s377
      %s378 = sphi 0, %s375
      %s379 = sphi 0, %s378
      %s395 = sphi 0, %s379
    $region4: #{tpu_custom_call.1} parent=1 // loop_header_branch
      %38 = sbr.rel (%p36) target = $region8
    $region5: #{tpu_custom_call.1} parent=1 // loop_body
      %s40 = ssub.s32 %s35, 1
      %s41 = ssub.s32 %s35, 2
      %s42 = sadd.s32 %s35, 1
      %s43 = ssub.s32 %s35, %s42
      %p44 = scmp.eq.s32.totalorder %s43, 0
      %s46 = sadd.s32 %s45, 1
      %s47 = scalar_select %p44, %s45, %s46
      %p50 = pneg %p44
      %p51 = scmp.eq.s32.totalorder %s35, 1
      %p52 = por %p50, %p51
      %p53 = scmp.ne.s32.totalorder %s45, %s48
      %p54 = scmp.eq.s32.totalorder %s35, 0
      %p55 = por %p53, %p54
      %p56 = scmp.ne.s32.totalorder %s45, %s48
      %p57 = scmp.eq.s32.totalorder %s40, 1
      %p58 = por %p56, %p57
      %p59 = scmp.ne.s32.totalorder %s48, %s49
      %p60 = scmp.eq.s32.totalorder %s40, 0
      %p61 = por %p59, %p60
      %p62 = scmp.ne.s32.totalorder %s48, %s49
      %p63 = scmp.eq.s32.totalorder %s41, 1
      %p64 = por %p62, %p63
      %p66 = scmp.ne.s32.totalorder %s49, %s65
      %p67 = scmp.eq.s32.totalorder %s41, 0
      %p68 = por %p66, %p67
      %s69 = ssub.s32 %s35, %s42
      %p70 = scmp.eq.s32.totalorder %s69, 0
      %s72 = sadd.s32 %s71, 1
      %s73 = scalar_select %p70, %s71, %s72
      %p76 = pneg %p70
      %p77 = scmp.eq.s32.totalorder %s35, 1
      %p78 = por %p76, %p77
      %p79 = scmp.ne.s32.totalorder %s71, %s74
      %p80 = scmp.eq.s32.totalorder %s35, 0
      %p81 = por %p79, %p80
      %p82 = scmp.ne.s32.totalorder %s71, %s74
      %p83 = scmp.eq.s32.totalorder %s40, 1
      %p84 = por %p82, %p83
      %p85 = scmp.ne.s32.totalorder %s74, %s75
      %p86 = scmp.eq.s32.totalorder %s40, 0
      %p87 = por %p85, %p86
      %p88 = scmp.ne.s32.totalorder %s74, %s75
      %p89 = scmp.eq.s32.totalorder %s41, 1
      %p90 = por %p88, %p89
      %p92 = scmp.ne.s32.totalorder %s75, %s91
      %p93 = scmp.eq.s32.totalorder %s41, 0
      %p94 = por %p92, %p93
      %s96 = sadd.s32 %s95, 1
      %p99 = scmp.eq.s32.totalorder %s35, 1
      %p100 = scmp.ne.s32.totalorder %s95, %s97
      %p101 = scmp.eq.s32.totalorder %s35, 0
      %p102 = por %p100, %p101
      %p103 = scmp.ne.s32.totalorder %s95, %s97
      %p104 = scmp.eq.s32.totalorder %s40, 1
      %p105 = por %p103, %p104
      %p106 = scmp.ne.s32.totalorder %s97, %s98
      %p107 = scmp.eq.s32.totalorder %s40, 0
      %p108 = por %p106, %p107
      %p109 = scmp.ne.s32.totalorder %s97, %s98
      %p110 = scmp.eq.s32.totalorder %s41, 1
      %p111 = por %p109, %p110
      %p113 = scmp.ne.s32.totalorder %s98, %s112
      %p114 = scmp.eq.s32.totalorder %s41, 0
      %p115 = por %p113, %p114
      %s117 = sadd.s32 %s116, 1
      %p120 = scmp.eq.s32.totalorder %s35, 1
      %p121 = scmp.ne.s32.totalorder %s116, %s118
      %p122 = scmp.eq.s32.totalorder %s35, 0
      %p123 = por %p121, %p122
      %p124 = scmp.ne.s32.totalorder %s116, %s118
      %p125 = scmp.eq.s32.totalorder %s40, 1
      %p126 = por %p124, %p125
      %p127 = scmp.ne.s32.totalorder %s118, %s119
      %p128 = scmp.eq.s32.totalorder %s40, 0
      %p129 = por %p127, %p128
      %p130 = scmp.ne.s32.totalorder %s118, %s119
      %p131 = scmp.eq.s32.totalorder %s41, 1
      %p132 = por %p130, %p131
      %p134 = scmp.ne.s32.totalorder %s119, %s133
      %p135 = scmp.eq.s32.totalorder %s41, 0
      %p136 = por %p134, %p135
      %s138 = sadd.s32 %s137, 1
      %p141 = scmp.eq.s32.totalorder %s35, 1
      %p142 = scmp.ne.s32.totalorder %s137, %s139
      %p143 = scmp.eq.s32.totalorder %s35, 0
      %p144 = por %p142, %p143
      %p145 = scmp.ne.s32.totalorder %s137, %s139
      %p146 = scmp.eq.s32.totalorder %s40, 1
      %p147 = por %p145, %p146
      %p148 = scmp.ne.s32.totalorder %s139, %s140
      %p149 = scmp.eq.s32.totalorder %s40, 0
      %p150 = por %p148, %p149
      %p151 = scmp.ne.s32.totalorder %s139, %s140
      %p152 = scmp.eq.s32.totalorder %s41, 1
      %p153 = por %p151, %p152
      %p155 = scmp.ne.s32.totalorder %s140, %s154
      %p156 = scmp.eq.s32.totalorder %s41, 0
      %p157 = por %p155, %p156
      %s159 = sadd.s32 %s158, 1
      %p162 = scmp.eq.s32.totalorder %s35, 1
      %p163 = scmp.ne.s32.totalorder %s158, %s160
      %p164 = scmp.eq.s32.totalorder %s35, 0
      %p165 = por %p163, %p164
      %p166 = scmp.ne.s32.totalorder %s158, %s160
      %p167 = scmp.eq.s32.totalorder %s40, 1
      %p168 = por %p166, %p167
      %p169 = scmp.ne.s32.totalorder %s160, %s161
      %p170 = scmp.eq.s32.totalorder %s40, 0
      %p171 = por %p169, %p170
      %p172 = scmp.ne.s32.totalorder %s160, %s161
      %p173 = scmp.eq.s32.totalorder %s41, 1
      %p174 = por %p172, %p173
      %p176 = scmp.ne.s32.totalorder %s161, %s175
      %p177 = scmp.eq.s32.totalorder %s41, 0
      %p178 = por %p176, %p177
      %s180 = sadd.s32 %s179, 1
      %p183 = scmp.eq.s32.totalorder %s35, 1
      %p184 = scmp.ne.s32.totalorder %s179, %s181
      %p185 = scmp.eq.s32.totalorder %s35, 0
      %p186 = por %p184, %p185
      %p187 = scmp.ne.s32.totalorder %s179, %s181
      %p188 = scmp.eq.s32.totalorder %s40, 1
      %p189 = por %p187, %p188
      %p190 = scmp.ne.s32.totalorder %s181, %s182
      %p191 = scmp.eq.s32.totalorder %s40, 0
      %p192 = por %p190, %p191
      %p193 = scmp.ne.s32.totalorder %s181, %s182
      %p194 = scmp.eq.s32.totalorder %s41, 1
      %p195 = por %p193, %p194
      %p197 = scmp.ne.s32.totalorder %s182, %s196
      %p198 = scmp.eq.s32.totalorder %s41, 0
      %p199 = por %p197, %p198
      %s201 = sadd.s32 %s200, 1
      %p204 = scmp.eq.s32.totalorder %s35, 1
      %p205 = scmp.ne.s32.totalorder %s200, %s202
      %p206 = scmp.eq.s32.totalorder %s35, 0
      %p207 = por %p205, %p206
      %p208 = scmp.ne.s32.totalorder %s200, %s202
      %p209 = scmp.eq.s32.totalorder %s40, 1
      %p210 = por %p208, %p209
      %p211 = scmp.ne.s32.totalorder %s202, %s203
      %p212 = scmp.eq.s32.totalorder %s40, 0
      %p213 = por %p211, %p212
      %p214 = scmp.ne.s32.totalorder %s202, %s203
      %p215 = scmp.eq.s32.totalorder %s41, 1
      %p216 = por %p214, %p215
      %p218 = scmp.ne.s32.totalorder %s203, %s217
      %p219 = scmp.eq.s32.totalorder %s41, 0
      %p220 = por %p218, %p219
      %s222 = sadd.s32 %s221, 1
      %p225 = scmp.eq.s32.totalorder %s35, 1
      %p226 = scmp.ne.s32.totalorder %s221, %s223
      %p227 = scmp.eq.s32.totalorder %s35, 0
      %p228 = por %p226, %p227
      %p229 = scmp.ne.s32.totalorder %s221, %s223
      %p230 = scmp.eq.s32.totalorder %s40, 1
      %p231 = por %p229, %p230
      %p232 = scmp.ne.s32.totalorder %s223, %s224
      %p233 = scmp.eq.s32.totalorder %s40, 0
      %p234 = por %p232, %p233
      %p235 = scmp.ne.s32.totalorder %s223, %s224
      %p236 = scmp.eq.s32.totalorder %s41, 1
      %p237 = por %p235, %p236
      %p239 = scmp.ne.s32.totalorder %s224, %s238
      %p240 = scmp.eq.s32.totalorder %s41, 0
      %p241 = por %p239, %p240
      %s243 = sadd.s32 %s242, 1
      %p246 = scmp.eq.s32.totalorder %s35, 1
      %p247 = scmp.ne.s32.totalorder %s242, %s244
      %p248 = scmp.eq.s32.totalorder %s35, 0
      %p249 = por %p247, %p248
      %p250 = scmp.ne.s32.totalorder %s242, %s244
      %p251 = scmp.eq.s32.totalorder %s40, 1
      %p252 = por %p250, %p251
      %p253 = scmp.ne.s32.totalorder %s244, %s245
      %p254 = scmp.eq.s32.totalorder %s40, 0
      %p255 = por %p253, %p254
      %p256 = scmp.ne.s32.totalorder %s244, %s245
      %p257 = scmp.eq.s32.totalorder %s41, 1
      %p258 = por %p256, %p257
      %p260 = scmp.ne.s32.totalorder %s245, %s259
      %p261 = scmp.eq.s32.totalorder %s41, 0
      %p262 = por %p260, %p261
      %s264 = sadd.s32 %s263, 1
      %p267 = scmp.eq.s32.totalorder %s35, 1
      %p268 = scmp.ne.s32.totalorder %s263, %s265
      %p269 = scmp.eq.s32.totalorder %s35, 0
      %p270 = por %p268, %p269
      %p271 = scmp.ne.s32.totalorder %s263, %s265
      %p272 = scmp.eq.s32.totalorder %s40, 1
      %p273 = por %p271, %p272
      %p274 = scmp.ne.s32.totalorder %s265, %s266
      %p275 = scmp.eq.s32.totalorder %s40, 0
      %p276 = por %p274, %p275
      %p277 = scmp.ne.s32.totalorder %s265, %s266
      %p278 = scmp.eq.s32.totalorder %s41, 1
      %p279 = por %p277, %p278
      %p281 = scmp.ne.s32.totalorder %s266, %s280
      %p282 = scmp.eq.s32.totalorder %s41, 0
      %p283 = por %p281, %p282
      %s285 = sadd.s32 %s284, 1
      %p288 = scmp.eq.s32.totalorder %s35, 1
      %p289 = scmp.ne.s32.totalorder %s284, %s286
      %p290 = scmp.eq.s32.totalorder %s35, 0
      %p291 = por %p289, %p290
      %p292 = scmp.ne.s32.totalorder %s284, %s286
      %p293 = scmp.eq.s32.totalorder %s40, 1
      %p294 = por %p292, %p293
      %p295 = scmp.ne.s32.totalorder %s286, %s287
      %p296 = scmp.eq.s32.totalorder %s40, 0
      %p297 = por %p295, %p296
      %p298 = scmp.ne.s32.totalorder %s286, %s287
      %p299 = scmp.eq.s32.totalorder %s41, 1
      %p300 = por %p298, %p299
      %p302 = scmp.ne.s32.totalorder %s287, %s301
      %p303 = scmp.eq.s32.totalorder %s41, 0
      %p304 = por %p302, %p303
      %s306 = sadd.s32 %s305, 1
      %p309 = scmp.eq.s32.totalorder %s35, 1
      %p310 = scmp.ne.s32.totalorder %s305, %s307
      %p311 = scmp.eq.s32.totalorder %s35, 0
      %p312 = por %p310, %p311
      %p313 = scmp.ne.s32.totalorder %s305, %s307
      %p314 = scmp.eq.s32.totalorder %s40, 1
      %p315 = por %p313, %p314
      %p316 = scmp.ne.s32.totalorder %s307, %s308
      %p317 = scmp.eq.s32.totalorder %s40, 0
      %p318 = por %p316, %p317
      %p319 = scmp.ne.s32.totalorder %s307, %s308
      %p320 = scmp.eq.s32.totalorder %s41, 1
      %p321 = por %p319, %p320
      %p323 = scmp.ne.s32.totalorder %s308, %s322
      %p324 = scmp.eq.s32.totalorder %s41, 0
      %p325 = por %p323, %p324
      %s327 = sadd.s32 %s326, 1
      %p330 = scmp.eq.s32.totalorder %s35, 1
      %p331 = scmp.ne.s32.totalorder %s326, %s328
      %p332 = scmp.eq.s32.totalorder %s35, 0
      %p333 = por %p331, %p332
      %p334 = scmp.ne.s32.totalorder %s326, %s328
      %p335 = scmp.eq.s32.totalorder %s40, 1
      %p336 = por %p334, %p335
      %p337 = scmp.ne.s32.totalorder %s328, %s329
      %p338 = scmp.eq.s32.totalorder %s40, 0
      %p339 = por %p337, %p338
      %p340 = scmp.ne.s32.totalorder %s328, %s329
      %p341 = scmp.eq.s32.totalorder %s41, 1
      %p342 = por %p340, %p341
      %p344 = scmp.ne.s32.totalorder %s329, %s343
      %p345 = scmp.eq.s32.totalorder %s41, 0
      %p346 = por %p344, %p345
      %s347 = ssub.s32 %s35, %s42
      %p348 = scmp.eq.s32.totalorder %s347, 0
      %s350 = sadd.s32 %s349, 1
      %s351 = scalar_select %p348, %s349, %s350
      %p354 = pneg %p348
      %p355 = scmp.eq.s32.totalorder %s35, 1
      %p356 = por %p354, %p355
      %p357 = scmp.ne.s32.totalorder %s349, %s352
      %p358 = scmp.eq.s32.totalorder %s35, 0
      %p359 = por %p357, %p358
      %p360 = scmp.ne.s32.totalorder %s349, %s352
      %p361 = scmp.eq.s32.totalorder %s40, 1
      %p362 = por %p360, %p361
      %p363 = scmp.ne.s32.totalorder %s352, %s353
      %p364 = scmp.eq.s32.totalorder %s40, 0
      %p365 = por %p363, %p364
      %p366 = scmp.ne.s32.totalorder %s352, %s353
      %p367 = scmp.eq.s32.totalorder %s41, 1
      %p368 = por %p366, %p367
      %p370 = scmp.ne.s32.totalorder %s353, %s369
      %p371 = scmp.eq.s32.totalorder %s41, 0
      %p372 = por %p370, %p371
      %s373 = ssub.s32 %s35, %s42
      %p374 = scmp.eq.s32.totalorder %s373, 0
      %s376 = sadd.s32 %s375, 1
      %s377 = scalar_select %p374, %s375, %s376
      %p380 = pneg %p374
      %p381 = scmp.eq.s32.totalorder %s35, 1
      %p382 = por %p380, %p381
      %p383 = scmp.ne.s32.totalorder %s375, %s378
      %p384 = scmp.eq.s32.totalorder %s35, 0
      %p385 = por %p383, %p384
      %p386 = scmp.ne.s32.totalorder %s375, %s378
      %p387 = scmp.eq.s32.totalorder %s40, 1
      %p388 = por %p386, %p387
      %p389 = scmp.ne.s32.totalorder %s378, %s379
      %p390 = scmp.eq.s32.totalorder %s40, 0
      %p391 = por %p389, %p390
      %p392 = scmp.ne.s32.totalorder %s378, %s379
      %p393 = scmp.eq.s32.totalorder %s41, 1
      %p394 = por %p392, %p393
      %p396 = scmp.ne.s32.totalorder %s379, %s395
      %p397 = scmp.eq.s32.totalorder %s41, 0
      %p398 = por %p396, %p397
      %p399 = scmp.le.s32.totalorder 1, %s35
      %p400 = scmp.lt.s32.totalorder %s35, 3
      %p401 = pnand %p399, %p400
      %p402 = pneg %p401
      // Predicated region
      $region9: #{tpu_custom_call.1} parent=5 // pred_check
        _
      $region10: #{tpu_custom_call.1} parent=5 // pred_check_branch
        %404 = sbr.rel (%p401) target = $region12
      $region11: #{tpu_custom_call.1} parent=5 // pred_region
        %s405 = ssub.s32 %s35, 1
        // Predicated region
        $region13: #{tpu_custom_call.1} parent=11 // pred_check
          %p406 = pneg %p108
        $region14: #{tpu_custom_call.1} parent=11 // pred_check_branch
          %408 = sbr.rel (%p406) target = $region16
        $region15: #{tpu_custom_call.1} parent=11 // pred_region
          _
        $region16: #{tpu_custom_call.1} parent=11 // pred_fallthru
          _
        // Predicated region
        $region17: #{tpu_custom_call.1} parent=11 // pred_check
          %p409 = pneg %p129
        $region18: #{tpu_custom_call.1} parent=11 // pred_check_branch
          %411 = sbr.rel (%p409) target = $region20
        $region19: #{tpu_custom_call.1} parent=11 // pred_region
          _
        $region20: #{tpu_custom_call.1} parent=11 // pred_fallthru
          _
        // Predicated region
        $region21: #{tpu_custom_call.1} parent=11 // pred_check
          %p412 = pneg %p150
        $region22: #{tpu_custom_call.1} parent=11 // pred_check_branch
          %414 = sbr.rel (%p412) target = $region24
        $region23: #{tpu_custom_call.1} parent=11 // pred_region
          %s416 = ssub.s32 512, 512
          %417 = vsyncadd [#allocation6], %s416
          %s418 = sshll.u32 [#allocation7], 4
          %s419 = int_to_ptr.vmem [resolvable:$true] %s418
          %424 = dma.hbm_to_vmem [thread:$0]  %s4, 512, %s419, [#allocation6], 128, 128, 8
        $region24: #{tpu_custom_call.1} parent=11 // pred_fallthru
          _
        // Predicated region
        $region25: #{tpu_custom_call.1} parent=11 // pred_check
          %p425 = pneg %p171
        $region26: #{tpu_custom_call.1} parent=11 // pred_check_branch
          %427 = sbr.rel (%p425) target = $region28
        $region27: #{tpu_custom_call.1} parent=11 // pred_region
          _
        $region28: #{tpu_custom_call.1} parent=11 // pred_fallthru
          _
        // Predicated region
        $region29: #{tpu_custom_call.1} parent=11 // pred_check
          %p428 = pneg %p192
        $region30: #{tpu_custom_call.1} parent=11 // pred_check_branch
          %430 = sbr.rel (%p428) target = $region32
        $region31: #{tpu_custom_call.1} parent=11 // pred_region
          %s432 = ssub.s32 512, 512
          %433 = vsyncadd [#allocation9], %s432
          %s434 = sshll.u32 [#allocation8], 4
          %s435 = int_to_ptr.vmem [resolvable:$true] %s434
          %440 = dma.hbm_to_vmem [thread:$0]  %s6, 512, %s435, [#allocation9], 128, 128, 8
        $region32: #{tpu_custom_call.1} parent=11 // pred_fallthru
          _
        // Predicated region
        $region33: #{tpu_custom_call.1} parent=11 // pred_check
          %p441 = pneg %p213
        $region34: #{tpu_custom_call.1} parent=11 // pred_check_branch
          %443 = sbr.rel (%p441) target = $region36
        $region35: #{tpu_custom_call.1} parent=11 // pred_region
          _
        $region36: #{tpu_custom_call.1} parent=11 // pred_fallthru
          _
        // Predicated region
        $region37: #{tpu_custom_call.1} parent=11 // pred_check
          %p444 = pneg %p234
        $region38: #{tpu_custom_call.1} parent=11 // pred_check_branch
          %446 = sbr.rel (%p444) target = $region40
        $region39: #{tpu_custom_call.1} parent=11 // pred_region
          _
        $region40: #{tpu_custom_call.1} parent=11 // pred_fallthru
          _
        // Predicated region
        $region41: #{tpu_custom_call.1} parent=11 // pred_check
          %p447 = pneg %p255
        $region42: #{tpu_custom_call.1} parent=11 // pred_check_branch
          %449 = sbr.rel (%p447) target = $region44
        $region43: #{tpu_custom_call.1} parent=11 // pred_region
          _
        $region44: #{tpu_custom_call.1} parent=11 // pred_fallthru
          _
        // Predicated region
        $region45: #{tpu_custom_call.1} parent=11 // pred_check
          %p450 = pneg %p276
        $region46: #{tpu_custom_call.1} parent=11 // pred_check_branch
          %452 = sbr.rel (%p450) target = $region48
        $region47: #{tpu_custom_call.1} parent=11 // pred_region
          _
        $region48: #{tpu_custom_call.1} parent=11 // pred_fallthru
          _
        // Predicated region
        $region49: #{tpu_custom_call.1} parent=11 // pred_check
          %p453 = pneg %p297
        $region50: #{tpu_custom_call.1} parent=11 // pred_check_branch
          %455 = sbr.rel (%p453) target = $region52
        $region51: #{tpu_custom_call.1} parent=11 // pred_region
          _
        $region52: #{tpu_custom_call.1} parent=11 // pred_fallthru
          _
        // Predicated region
        $region53: #{tpu_custom_call.1} parent=11 // pred_check
          %p456 = pneg %p318
        $region54: #{tpu_custom_call.1} parent=11 // pred_check_branch
          %458 = sbr.rel (%p456) target = $region56
        $region55: #{tpu_custom_call.1} parent=11 // pred_region
          _
        $region56: #{tpu_custom_call.1} parent=11 // pred_fallthru
          _
        // Predicated region
        $region57: #{tpu_custom_call.1} parent=11 // pred_check
          %p459 = pneg %p339
        $region58: #{tpu_custom_call.1} parent=11 // pred_check_branch
          %461 = sbr.rel (%p459) target = $region60
        $region59: #{tpu_custom_call.1} parent=11 // pred_region
          _
        $region60: #{tpu_custom_call.1} parent=11 // pred_fallthru
          _
      $region12: #{tpu_custom_call.1} parent=5 // pred_fallthru
        _
      %p462 = scmp.lt.s32.totalorder %s35, 2
      // Predicated region
      $region61: #{tpu_custom_call.1} parent=5 // pred_check
        %p463 = pneg %p462
      $region62: #{tpu_custom_call.1} parent=5 // pred_check_branch
        %465 = sbr.rel (%p463) target = $region64
      $region63: #{tpu_custom_call.1} parent=5 // pred_region
        // Predicated region
        $region65: #{tpu_custom_call.1} parent=63 // pred_check
          %p466 = pneg %p55
        $region66: #{tpu_custom_call.1} parent=63 // pred_check_branch
          %468 = sbr.rel (%p466) target = $region68
        $region67: #{tpu_custom_call.1} parent=63 // pred_region
          %s469 = sand.u32 %s45, 1
          %s470 = scalar_lea.sflag [#allocation3], %s469
          %s471 = sand.u32 %s45, 1
          %s472 = smul.addr %s471, 8
          %s473 = scalar_lea.vmem [#allocation2], %s472
          %s475 = ssub.s32 128, 128
          %476 = vsyncadd %s470, %s475
          %s477 = smul.addr %s35, 128
          %s478 = scalar_lea.hbm %s0, %s477
          %s480 = sshll.u32 %s473, 4
          %s481 = int_to_ptr.vmem [resolvable:$true] %s480
          %483 = dma.hbm_to_vmem [thread:$0]  %s478, 128, %s481, %s470
        $region68: #{tpu_custom_call.1} parent=63 // pred_fallthru
          _
        // Predicated region
        $region69: #{tpu_custom_call.1} parent=63 // pred_check
          %p484 = pneg %p81
        $region70: #{tpu_custom_call.1} parent=63 // pred_check_branch
          %486 = sbr.rel (%p484) target = $region72
        $region71: #{tpu_custom_call.1} parent=63 // pred_region
          %s487 = sand.u32 %s35, 1
          %s488 = scalar_lea.sflag [#allocation6], %s487
          %s489 = sand.u32 %s71, 1
          %s490 = smul.addr %s489, 8
          %s491 = scalar_lea.vmem [#allocation5], %s490
          %s493 = ssub.s32 128, 128
          %494 = vsyncadd %s488, %s493
          %s495 = smul.addr %s35, 128
          %s496 = scalar_lea.hbm %s1, %s495
          %s498 = sshll.u32 %s491, 4
          %s499 = int_to_ptr.vmem [resolvable:$true] %s498
          %501 = dma.hbm_to_vmem [thread:$0]  %s496, 128, %s499, %s488
        $region72: #{tpu_custom_call.1} parent=63 // pred_fallthru
          _
      $region64: #{tpu_custom_call.1} parent=5 // pred_fallthru
        _
      %p502 = scmp.le.s32.totalorder 1, %s35
      %p503 = scmp.lt.s32.totalorder %s35, 3
      %p504 = pnand %p502, %p503
      %p505 = pneg %p504
      // Predicated region
      $region73: #{tpu_custom_call.1} parent=5 // pred_check
        _
      $region74: #{tpu_custom_call.1} parent=5 // pred_check_branch
        %507 = sbr.rel (%p504) target = $region76
      $region75: #{tpu_custom_call.1} parent=5 // pred_region
        %s508 = ssub.s32 %s35, 1
        %s509 = sand.u32 %s48, 1
        %s510 = scalar_lea.sflag [#allocation3], %s509
        %s511 = sand.u32 %s48, 1
        %s512 = smul.addr %s511, 8
        %s513 = scalar_lea.vmem [#allocation2], %s512
        // Predicated region
        $region77: #{tpu_custom_call.1} parent=75 // pred_check
          %p514 = pneg %p61
        $region78: #{tpu_custom_call.1} parent=75 // pred_check_branch
          %516 = sbr.rel (%p514) target = $region80
        $region79: #{tpu_custom_call.1} parent=75 // pred_region
          %517 = dma.done %s510, 128
        $region80: #{tpu_custom_call.1} parent=75 // pred_fallthru
          _
        %s518 = sand.u32 %s40, 1
        %s519 = scalar_lea.sflag [#allocation6], %s518
        %s520 = sand.u32 %s74, 1
        %s521 = smul.addr %s520, 8
        %s522 = scalar_lea.vmem [#allocation5], %s521
        // Predicated region
        $region81: #{tpu_custom_call.1} parent=75 // pred_check
          %p523 = pneg %p87
        $region82: #{tpu_custom_call.1} parent=75 // pred_check_branch
          %525 = sbr.rel (%p523) target = $region84
        $region83: #{tpu_custom_call.1} parent=75 // pred_region
          %526 = dma.done %s519, 128
        $region84: #{tpu_custom_call.1} parent=75 // pred_fallthru
          _
        // Predicated region
        $region85: #{tpu_custom_call.1} parent=75 // pred_check
          %p527 = pneg %p150
        $region86: #{tpu_custom_call.1} parent=75 // pred_check_branch
          %529 = sbr.rel (%p527) target = $region88
        $region87: #{tpu_custom_call.1} parent=75 // pred_region
          %530 = dma.done [#allocation6], 512
        $region88: #{tpu_custom_call.1} parent=75 // pred_fallthru
          _
        // Predicated region
        $region89: #{tpu_custom_call.1} parent=75 // pred_check
          %p531 = pneg %p192
        $region90: #{tpu_custom_call.1} parent=75 // pred_check_branch
          %533 = sbr.rel (%p531) target = $region92
        $region91: #{tpu_custom_call.1} parent=75 // pred_region
          %534 = dma.done [#allocation9], 512
        $region92: #{tpu_custom_call.1} parent=75 // pred_fallthru
          _
        %s535 = sand.u32 %s48, 1
        %s536 = scalar_lea.sflag [#allocation3], %s535
        %s537 = sand.u32 %s48, 1
        %s538 = smul.addr %s537, 8
        %s539 = scalar_lea.vmem [#allocation2], %s538
        %p540 = pneg %p61
        %p541 = pneg %p58
        %s542 = sand.u32 %s40, 1
        %s543 = scalar_lea.sflag [#allocation6], %s542
        %s544 = sand.u32 %s74, 1
        %s545 = smul.addr %s544, 8
        %s546 = scalar_lea.vmem [#allocation5], %s545
        %p547 = pneg %p87
        %p548 = pneg %p84
        %p549 = pneg %p108
        %p550 = pneg %p105
        %p551 = pneg %p129
        %p552 = pneg %p126
        %p553 = pneg %p150
        %p554 = pneg %p147
        %p555 = pneg %p171
        %p556 = pneg %p168
        %p557 = pneg %p192
        %p558 = pneg %p189
        %p559 = pneg %p213
        %p560 = pneg %p210
        %p561 = pneg %p234
        %p562 = pneg %p231
        %p563 = pneg %p255
        %p564 = pneg %p252
        %p565 = pneg %p276
        %p566 = pneg %p273
        %p567 = pneg %p297
        %p568 = pneg %p294
        %p569 = pneg %p318
        %p570 = pneg %p315
        %p571 = pneg %p339
        %p572 = pneg %p336
        %p573 = pneg %p365
        %p574 = pneg %p362
        %s575 = sand.u32 %s352, 1
        %s576 = scalar_lea.sflag [#allocation4], %s575
        %s577 = sand.u32 %s352, 1
        %s578 = smul.addr %s577, 8
        %s579 = scalar_lea.vmem [#allocation10], %s578
        %p580 = pneg %p391
        %p581 = pneg %p388
        %s582 = sand.u32 %s378, 1
        %s583 = scalar_lea.sflag [#allocation12], %s582
        %s584 = sand.u32 %s378, 1
        %s585 = smul.addr %s584, 8
        %s586 = scalar_lea.vmem [#allocation11], %s585
        %v587 = vld [vmem:[%s513] sm:$0xff]
        %v588 = vld [vmem:[%s522] sm:$0xff]
        %v589 = vld [vmem:[%s2] sm:$0xff]
        %v590 = vld [vmem:[%s2 + $0x8] sm:$0xff]
        %v591 = vld [vmem:[%s2 + $0x10] sm:$0xff]
        %v592 = vld [vmem:[%s2 + $0x18] sm:$0xff]
        %v593 = vld [vmem:[#allocation7] sm:$0xff]
        %v594 = vld [vmem:[#allocation7 + $0x8] sm:$0xff]
        %v595 = vld [vmem:[#allocation7 + $0x10] sm:$0xff]
        %v596 = vld [vmem:[#allocation7 + $0x18] sm:$0xff]
        %v597 = vld [vmem:[#allocation8] sm:$0xff]
        %v598 = vld [vmem:[#allocation8 + $0x8] sm:$0xff]
        %v599 = vld [vmem:[#allocation8 + $0x10] sm:$0xff]
        %v600 = vld [vmem:[#allocation8 + $0x18] sm:$0xff]
        %v601 = vld [vmem:[%s3] sm:$0x1]
        %v602 = vld [vmem:[%s5] sm:$0x1]
        %v603 = vld [vmem:[%s7] sm:$0x1]
        %v605 = vlaneseq
        %v606 = vshrl.u32 %v605, 7
        %v607 = vsub.s32 0, %v606
        %v608 = vrot.slane %v601, %v607
        %vm610 = vcmask 261120
        %v612 = vsel %vm610, %v587, 0
        %614 = vmatprep.subr.mxu0 0.0
        %615 = vmatpush1.msra.mxu0 %v589
        %616 = vmatprep.subr.mxu0 0.0
        %617 = vmatpush1.msra.mxu0 %v590
        %618 = vmatprep.subr.mxu0 0.0
        %619 = vmatpush1.msra.mxu0 %v591
        %620 = vmatprep.subr.mxu0 0.0
        %621 = vmatpush1.msra.mxu0 %v592
        %622 = vmatprep.subr.mxu0 0.0
        %623 = vmatpush1.msra.mxu0 0.0
        %624 = vmatprep.subr.mxu0 0.0
        %625 = vmatpush1.msra.mxu0 0.0
        %626 = vmatprep.subr.mxu0 0.0
        %627 = vmatpush1.msra.mxu0 0.0
        %628 = vmatprep.subr.mxu0 0.0
        %629 = vmatpush1.msra.mxu0 0.0
        %630 = vmatprep.subr.mxu0 0.0
        %631 = vmatpush1.msra.mxu0 0.0
        %632 = vmatprep.subr.mxu0 0.0
        %633 = vmatpush1.msra.mxu0 0.0
        %634 = vmatprep.subr.mxu0 0.0
        %635 = vmatpush1.msra.mxu0 0.0
        %636 = vmatprep.subr.mxu0 0.0
        %637 = vmatpush1.msra.mxu0 0.0
        %638 = vmatprep.subr.mxu0 0.0
        %639 = vmatpush1.msra.mxu0 0.0
        %640 = vmatprep.subr.mxu0 0.0
        %641 = vmatpush1.msra.mxu0 0.0
        %642 = vmatprep.subr.mxu0 0.0
        %643 = vmatpush1.msra.mxu0 0.0
        %644 = vmatprep.subr.mxu0 0.0
        %645 = vmatpush1.msra.mxu0 0.0
        %646 = vmatprep.subr.mxu0 0.0
        %647 = vmatpush1.msra.mxu0 0.0
        %648 = vmatprep.subr.mxu0 0.0
        %649 = vmatpush1.msra.mxu0 0.0
        %650 = vmatprep.subr.mxu0 0.0
        %651 = vmatpush1.msra.mxu0 0.0
        %652 = vmatprep.subr.mxu0 0.0
        %653 = vmatpush1.msra.mxu0 0.0
        %654 = vmatprep.subr.mxu0 0.0
        %655 = vmatpush1.msra.mxu0 0.0
        %656 = vmatprep.subr.mxu0 0.0
        %657 = vmatpush1.msra.mxu0 0.0
        %658 = vmatprep.subr.mxu0 0.0
        %659 = vmatpush1.msra.mxu0 0.0
        %660 = vmatprep.subr.mxu0 0.0
        %661 = vmatpush1.msra.mxu0 0.0
        %662 = vmatprep.subr.mxu0 0.0
        %663 = vmatpush1.msra.mxu0 0.0
        %664 = vmatprep.subr.mxu0 0.0
        %665 = vmatpush1.msra.mxu0 0.0
        %666 = vmatprep.subr.mxu0 0.0
        %667 = vmatpush1.msra.mxu0 0.0
        %668 = vmatprep.subr.mxu0 0.0
        %669 = vmatpush1.msra.mxu0 0.0
        %670 = vmatprep.subr.mxu0 0.0
        %671 = vmatpush1.msra.mxu0 0.0
        %672 = vmatprep.subr.mxu0 0.0
        %673 = vmatpush1.msra.mxu0 0.0
        %674 = vmatprep.subr.mxu0 0.0
        %675 = vmatpush1.msra.mxu0 0.0
        %676 = vmatprep.subr.mxu0 0.0
        %677 = vmatpush1.msra.mxu0 0.0
        %678 = vmatprep.mubr.f32.mxu0 0.0
        %679 = vmatmul.mubr.f32.gmra.mrb[0].mxu0 %v612
        %v680 = vpop.f32.mrb[0].mxu0
        %v681 = vadd.f32 %v608, %v680
        %v682 = vpop.f32.mrb[0].mxu0
        %683 = vdwg.mxu0
        %v685 = vsel %vm610, %v588, 0
        %687 = vmatprep.subr.mxu0 0.0
        %688 = vmatpush1.msra.mxu0 %v589
        %689 = vmatprep.subr.mxu0 0.0
        %690 = vmatpush1.msra.mxu0 %v590
        %691 = vmatprep.subr.mxu0 0.0
        %692 = vmatpush1.msra.mxu0 %v591
        %693 = vmatprep.subr.mxu0 0.0
        %694 = vmatpush1.msra.mxu0 %v592
        %695 = vmatprep.subr.mxu0 0.0
        %696 = vmatpush1.msra.mxu0 0.0
        %697 = vmatprep.subr.mxu0 0.0
        %698 = vmatpush1.msra.mxu0 0.0
        %699 = vmatprep.subr.mxu0 0.0
        %700 = vmatpush1.msra.mxu0 0.0
        %701 = vmatprep.subr.mxu0 0.0
        %702 = vmatpush1.msra.mxu0 0.0
        %703 = vmatprep.subr.mxu0 0.0
        %704 = vmatpush1.msra.mxu0 0.0
        %705 = vmatprep.subr.mxu0 0.0
        %706 = vmatpush1.msra.mxu0 0.0
        %707 = vmatprep.subr.mxu0 0.0
        %708 = vmatpush1.msra.mxu0 0.0
        %709 = vmatprep.subr.mxu0 0.0
        %710 = vmatpush1.msra.mxu0 0.0
        %711 = vmatprep.subr.mxu0 0.0
        %712 = vmatpush1.msra.mxu0 0.0
        %713 = vmatprep.subr.mxu0 0.0
        %714 = vmatpush1.msra.mxu0 0.0
        %715 = vmatprep.subr.mxu0 0.0
        %716 = vmatpush1.msra.mxu0 0.0
        %717 = vmatprep.subr.mxu0 0.0
        %718 = vmatpush1.msra.mxu0 0.0
        %719 = vmatprep.subr.mxu0 0.0
        %720 = vmatpush1.msra.mxu0 0.0
        %721 = vmatprep.subr.mxu0 0.0
        %722 = vmatpush1.msra.mxu0 0.0
        %723 = vmatprep.subr.mxu0 0.0
        %724 = vmatpush1.msra.mxu0 0.0
        %725 = vmatprep.subr.mxu0 0.0
        %726 = vmatpush1.msra.mxu0 0.0
        %727 = vmatprep.subr.mxu0 0.0
        %728 = vmatpush1.msra.mxu0 0.0
        %729 = vmatprep.subr.mxu0 0.0
        %730 = vmatpush1.msra.mxu0 0.0
        %731 = vmatprep.subr.mxu0 0.0
        %732 = vmatpush1.msra.mxu0 0.0
        %733 = vmatprep.subr.mxu0 0.0
        %734 = vmatpush1.msra.mxu0 0.0
        %735 = vmatprep.subr.mxu0 0.0
        %736 = vmatpush1.msra.mxu0 0.0
        %737 = vmatprep.subr.mxu0 0.0
        %738 = vmatpush1.msra.mxu0 0.0
        %739 = vmatprep.subr.mxu0 0.0
        %740 = vmatpush1.msra.mxu0 0.0
        %741 = vmatprep.subr.mxu0 0.0
        %742 = vmatpush1.msra.mxu0 0.0
        %743 = vmatprep.subr.mxu0 0.0
        %744 = vmatpush1.msra.mxu0 0.0
        %745 = vmatprep.subr.mxu0 0.0
        %746 = vmatpush1.msra.mxu0 0.0
        %747 = vmatprep.subr.mxu0 0.0
        %748 = vmatpush1.msra.mxu0 0.0
        %749 = vmatprep.subr.mxu0 0.0
        %750 = vmatpush1.msra.mxu0 0.0
        %751 = vmatprep.mubr.f32.mxu0 0.0
        %752 = vmatmul.mubr.f32.gmra.mrb[0].mxu0 %v685
        %v753 = vpop.f32.mrb[0].mxu0
        %v754 = vadd.f32 %v608, %v753
        %v755 = vpop.f32.mrb[0].mxu0
        %756 = vdwg.mxu0
        %v758 = vlaneseq
        %v759 = vshrl.u32 %v758, 7
        %v760 = vsub.s32 0, %v759
        %v761 = vrot.slane %v602, %v760
        %763 = vmatprep.subr.mxu0 0.0
        %764 = vmatpush1.msra.mxu0 %v593
        %765 = vmatprep.subr.mxu0 0.0
        %766 = vmatpush1.msra.mxu0 %v594
        %767 = vmatprep.subr.mxu0 0.0
        %768 = vmatpush1.msra.mxu0 %v595
        %769 = vmatprep.subr.mxu0 0.0
        %770 = vmatpush1.msra.mxu0 %v596
        %771 = vmatprep.subr.mxu0 0.0
        %772 = vmatpush1.msra.mxu0 0.0
        %773 = vmatprep.subr.mxu0 0.0
        %774 = vmatpush1.msra.mxu0 0.0
        %775 = vmatprep.subr.mxu0 0.0
        %776 = vmatpush1.msra.mxu0 0.0
        %777 = vmatprep.subr.mxu0 0.0
        %778 = vmatpush1.msra.mxu0 0.0
        %779 = vmatprep.subr.mxu0 0.0
        %780 = vmatpush1.msra.mxu0 0.0
        %781 = vmatprep.subr.mxu0 0.0
        %782 = vmatpush1.msra.mxu0 0.0
        %783 = vmatprep.subr.mxu0 0.0
        %784 = vmatpush1.msra.mxu0 0.0
        %785 = vmatprep.subr.mxu0 0.0
        %786 = vmatpush1.msra.mxu0 0.0
        %787 = vmatprep.subr.mxu0 0.0
        %788 = vmatpush1.msra.mxu0 0.0
        %789 = vmatprep.subr.mxu0 0.0
        %790 = vmatpush1.msra.mxu0 0.0
        %791 = vmatprep.subr.mxu0 0.0
        %792 = vmatpush1.msra.mxu0 0.0
        %793 = vmatprep.subr.mxu0 0.0
        %794 = vmatpush1.msra.mxu0 0.0
        %795 = vmatprep.subr.mxu0 0.0
        %796 = vmatpush1.msra.mxu0 0.0
        %797 = vmatprep.subr.mxu0 0.0
        %798 = vmatpush1.msra.mxu0 0.0
        %799 = vmatprep.subr.mxu0 0.0
        %800 = vmatpush1.msra.mxu0 0.0
        %801 = vmatprep.subr.mxu0 0.0
        %802 = vmatpush1.msra.mxu0 0.0
        %803 = vmatprep.subr.mxu0 0.0
        %804 = vmatpush1.msra.mxu0 0.0
        %805 = vmatprep.subr.mxu0 0.0
        %806 = vmatpush1.msra.mxu0 0.0
        %807 = vmatprep.subr.mxu0 0.0
        %808 = vmatpush1.msra.mxu0 0.0
        %809 = vmatprep.subr.mxu0 0.0
        %810 = vmatpush1.msra.mxu0 0.0
        %811 = vmatprep.subr.mxu0 0.0
        %812 = vmatpush1.msra.mxu0 0.0
        %813 = vmatprep.subr.mxu0 0.0
        %814 = vmatpush1.msra.mxu0 0.0
        %815 = vmatprep.subr.mxu0 0.0
        %816 = vmatpush1.msra.mxu0 0.0
        %817 = vmatprep.subr.mxu0 0.0
        %818 = vmatpush1.msra.mxu0 0.0
        %819 = vmatprep.subr.mxu0 0.0
        %820 = vmatpush1.msra.mxu0 0.0
        %821 = vmatprep.subr.mxu0 0.0
        %822 = vmatpush1.msra.mxu0 0.0
        %823 = vmatprep.subr.mxu0 0.0
        %824 = vmatpush1.msra.mxu0 0.0
        %825 = vmatprep.subr.mxu0 0.0
        %826 = vmatpush1.msra.mxu0 0.0
        %827 = vmatprep.mubr.f32.mxu0 0.0
        %828 = vmatmul.mubr.f32.gmra.mrb[0].mxu0 %v612
        %v829 = vpop.f32.mrb[0].mxu0
        %v830 = vadd.f32 %v761, %v829
        %v831 = vpop.f32.mrb[0].mxu0
        %832 = vdwg.mxu0
        %833 = vmatprep.subr.mxu0 0.0
        %834 = vmatpush1.msra.mxu0 %v593
        %835 = vmatprep.subr.mxu0 0.0
        %836 = vmatpush1.msra.mxu0 %v594
        %837 = vmatprep.subr.mxu0 0.0
        %838 = vmatpush1.msra.mxu0 %v595
        %839 = vmatprep.subr.mxu0 0.0
        %840 = vmatpush1.msra.mxu0 %v596
        %841 = vmatprep.subr.mxu0 0.0
        %842 = vmatpush1.msra.mxu0 0.0
        %843 = vmatprep.subr.mxu0 0.0
        %844 = vmatpush1.msra.mxu0 0.0
        %845 = vmatprep.subr.mxu0 0.0
        %846 = vmatpush1.msra.mxu0 0.0
        %847 = vmatprep.subr.mxu0 0.0
        %848 = vmatpush1.msra.mxu0 0.0
        %849 = vmatprep.subr.mxu0 0.0
        %850 = vmatpush1.msra.mxu0 0.0
        %851 = vmatprep.subr.mxu0 0.0
        %852 = vmatpush1.msra.mxu0 0.0
        %853 = vmatprep.subr.mxu0 0.0
        %854 = vmatpush1.msra.mxu0 0.0
        %855 = vmatprep.subr.mxu0 0.0
        %856 = vmatpush1.msra.mxu0 0.0
        %857 = vmatprep.subr.mxu0 0.0
        %858 = vmatpush1.msra.mxu0 0.0
        %859 = vmatprep.subr.mxu0 0.0
        %860 = vmatpush1.msra.mxu0 0.0
        %861 = vmatprep.subr.mxu0 0.0
        %862 = vmatpush1.msra.mxu0 0.0
        %863 = vmatprep.subr.mxu0 0.0
        %864 = vmatpush1.msra.mxu0 0.0
        %865 = vmatprep.subr.mxu0 0.0
        %866 = vmatpush1.msra.mxu0 0.0
        %867 = vmatprep.subr.mxu0 0.0
        %868 = vmatpush1.msra.mxu0 0.0
        %869 = vmatprep.subr.mxu0 0.0
        %870 = vmatpush1.msra.mxu0 0.0
        %871 = vmatprep.subr.mxu0 0.0
        %872 = vmatpush1.msra.mxu0 0.0
        %873 = vmatprep.subr.mxu0 0.0
        %874 = vmatpush1.msra.mxu0 0.0
        %875 = vmatprep.subr.mxu0 0.0
        %876 = vmatpush1.msra.mxu0 0.0
        %877 = vmatprep.subr.mxu0 0.0
        %878 = vmatpush1.msra.mxu0 0.0
        %879 = vmatprep.subr.mxu0 0.0
        %880 = vmatpush1.msra.mxu0 0.0
        %881 = vmatprep.subr.mxu0 0.0
        %882 = vmatpush1.msra.mxu0 0.0
        %883 = vmatprep.subr.mxu0 0.0
        %884 = vmatpush1.msra.mxu0 0.0
        %885 = vmatprep.subr.mxu0 0.0
        %886 = vmatpush1.msra.mxu0 0.0
        %887 = vmatprep.subr.mxu0 0.0
        %888 = vmatpush1.msra.mxu0 0.0
        %889 = vmatprep.subr.mxu0 0.0
        %890 = vmatpush1.msra.mxu0 0.0
        %891 = vmatprep.subr.mxu0 0.0
        %892 = vmatpush1.msra.mxu0 0.0
        %893 = vmatprep.subr.mxu0 0.0
        %894 = vmatpush1.msra.mxu0 0.0
        %895 = vmatprep.subr.mxu0 0.0
        %896 = vmatpush1.msra.mxu0 0.0
        %897 = vmatprep.mubr.f32.mxu0 0.0
        %898 = vmatmul.mubr.f32.gmra.mrb[0].mxu0 %v685
        %v899 = vpop.f32.mrb[0].mxu0
        %v900 = vadd.f32 %v761, %v899
        %v901 = vpop.f32.mrb[0].mxu0
        %902 = vdwg.mxu0
        %v903 = vmul.f32 %v681, 0.5
        %v904 = vmul.f32 %v754, 0.5
        %vm905 = vcmask 130048
        %v907 = vsel %vm905, %v903, 0
        %v910 = vsel %vm905, %v904, 0
        %912 = vmatprep.subr.mxu0 0.0
        %913 = vmatpush1.xpose.msra.mxu0 %v910
        %914 = vmatprep.subr.mxu0 0.0
        %915 = vmatpush1.xpose.msra.mxu0 0.0
        %916 = vmatprep.subr.mxu0 0.0
        %917 = vmatpush1.xpose.msra.mxu0 0.0
        %918 = vmatprep.subr.mxu0 0.0
        %919 = vmatpush1.xpose.msra.mxu0 0.0
        %920 = vmatprep.subr.mxu0 0.0
        %921 = vmatpush1.xpose.msra.mxu0 0.0
        %922 = vmatprep.subr.mxu0 0.0
        %923 = vmatpush1.xpose.msra.mxu0 0.0
        %924 = vmatprep.subr.mxu0 0.0
        %925 = vmatpush1.xpose.msra.mxu0 0.0
        %926 = vmatprep.subr.mxu0 0.0
        %927 = vmatpush1.xpose.msra.mxu0 0.0
        %928 = vmatprep.subr.mxu0 0.0
        %929 = vmatpush1.xpose.msra.mxu0 0.0
        %930 = vmatprep.subr.mxu0 0.0
        %931 = vmatpush1.xpose.msra.mxu0 0.0
        %932 = vmatprep.subr.mxu0 0.0
        %933 = vmatpush1.xpose.msra.mxu0 0.0
        %934 = vmatprep.subr.mxu0 0.0
        %935 = vmatpush1.xpose.msra.mxu0 0.0
        %936 = vmatprep.subr.mxu0 0.0
        %937 = vmatpush1.xpose.msra.mxu0 0.0
        %938 = vmatprep.subr.mxu0 0.0
        %939 = vmatpush1.xpose.msra.mxu0 0.0
        %940 = vmatprep.subr.mxu0 0.0
        %941 = vmatpush1.xpose.msra.mxu0 0.0
        %942 = vmatprep.subr.mxu0 0.0
        %943 = vmatpush1.xpose.msra.mxu0 0.0
        %944 = vmatprep.subr.mxu0 0.0
        %945 = vmatpush1.xpose.msra.mxu0 0.0
        %946 = vmatprep.subr.mxu0 0.0
        %947 = vmatpush1.xpose.msra.mxu0 0.0
        %948 = vmatprep.subr.mxu0 0.0
        %949 = vmatpush1.xpose.msra.mxu0 0.0
        %950 = vmatprep.subr.mxu0 0.0
        %951 = vmatpush1.xpose.msra.mxu0 0.0
        %952 = vmatprep.subr.mxu0 0.0
        %953 = vmatpush1.xpose.msra.mxu0 0.0
        %954 = vmatprep.subr.mxu0 0.0
        %955 = vmatpush1.xpose.msra.mxu0 0.0
        %956 = vmatprep.subr.mxu0 0.0
        %957 = vmatpush1.xpose.msra.mxu0 0.0
        %958 = vmatprep.subr.mxu0 0.0
        %959 = vmatpush1.xpose.msra.mxu0 0.0
        %960 = vmatprep.subr.mxu0 0.0
        %961 = vmatpush1.xpose.msra.mxu0 0.0
        %962 = vmatprep.subr.mxu0 0.0
        %963 = vmatpush1.xpose.msra.mxu0 0.0
        %964 = vmatprep.subr.mxu0 0.0
        %965 = vmatpush1.xpose.msra.mxu0 0.0
        %966 = vmatprep.subr.mxu0 0.0
        %967 = vmatpush1.xpose.msra.mxu0 0.0
        %968 = vmatprep.subr.mxu0 0.0
        %969 = vmatpush1.xpose.msra.mxu0 0.0
        %970 = vmatprep.subr.mxu0 0.0
        %971 = vmatpush1.xpose.msra.mxu0 0.0
        %972 = vmatprep.subr.mxu0 0.0
        %973 = vmatpush1.xpose.msra.mxu0 0.0
        %974 = vmatprep.subr.mxu0 0.0
        %975 = vmatpush1.xpose.msra.mxu0 0.0
        %976 = vmatprep.mubr.f32.mxu0 0.0
        %977 = vmatmul.mubr.f32.gmra.mrb[0].mxu0 %v907
        %v978 = vpop.f32.mrb[0].mxu0
        %v979 = vadd.f32 0.0, %v978
        %v980 = vpop.f32.mrb[0].mxu0
        %981 = vdwg.mxu0
        %vm982 = vcmask 64512
        %v983 = vsel %vm982, %v979, -inf
        %984 = vmax.xlane.f32.xlu0 %v983
        %v985 = vpop.xlane.xlu0 %984
        %v986 = vsub.f32 %v979, %v985
        %v987 = vmul.f32 %v986, 1.442695
        %v988 = vpow.pop %v987
        %v989 = vsel %vm982, %v988, 0.0
        %990 = vadd.xlane.f32.xlu0 %v989
        %v991 = vpop.xlane.xlu0 %990
        %v992 = vrcp.pop %v991
        %v993 = vmul.f32 %v988, %v992
        %994 = vxpose.xlu0.b32.start [1/16] %v979, 128
        %995 = vxpose.xlu0.b32.cont [2/16] 0.0, 128
        %996 = vxpose.xlu0.b32.cont [3/16] 0.0, 128
        %997 = vxpose.xlu0.b32.cont [4/16] 0.0, 128
        %998 = vxpose.xlu0.b32.cont [5/16] 0.0, 128
        %999 = vxpose.xlu0.b32.cont [6/16] 0.0, 128
        %1000 = vxpose.xlu0.b32.cont [7/16] 0.0, 128
        %1001 = vxpose.xlu0.b32.cont [8/16] 0.0, 128
        %1002 = vxpose.xlu0.b32.cont [9/16] 0.0, 128
        %1003 = vxpose.xlu0.b32.cont [10/16] 0.0, 128
        %1004 = vxpose.xlu0.b32.cont [11/16] 0.0, 128
        %1005 = vxpose.xlu0.b32.cont [12/16] 0.0, 128
        %1006 = vxpose.xlu0.b32.cont [13/16] 0.0, 128
        %1007 = vxpose.xlu0.b32.cont [14/16] 0.0, 128
        %1008 = vxpose.xlu0.b32.cont [15/16] 0.0, 128
        %1009 = vxpose.xlu0.b32.end [16/16] 0.0, 128
        %v1010 = vpop.trf.xlu0
        %v1011 = vpop.trf.xlu0
        %v1012 = vpop.trf.xlu0
        %v1013 = vpop.trf.xlu0
        %v1014 = vpop.trf.xlu0
        %v1015 = vpop.trf.xlu0
        %v1016 = vpop.trf.xlu0
        %v1017 = vpop.trf.xlu0
        %v1018 = vpop.trf.xlu0
        %v1019 = vpop.trf.xlu0
        %v1020 = vpop.trf.xlu0
        %v1021 = vpop.trf.xlu0
        %v1022 = vpop.trf.xlu0
        %v1023 = vpop.trf.xlu0
        %v1024 = vpop.trf.xlu0
        %v1025 = vpop.trf.xlu0
        %v1026 = vsel %vm982, %v1010, -inf
        %1027 = vmax.xlane.f32.xlu0 %v1026
        %v1028 = vpop.xlane.xlu0 %1027
        %v1029 = vsub.f32 %v1010, %v1028
        %v1030 = vmul.f32 %v1029, 1.442695
        %v1031 = vpow.pop %v1030
        %v1032 = vsel %vm982, %v1031, 0.0
        %1033 = vadd.xlane.f32.xlu0 %v1032
        %v1034 = vpop.xlane.xlu0 %1033
        %v1035 = vrcp.pop %v1034
        %v1036 = vmul.f32 %v1031, %v1035
        %v1038 = vsel %vm982, %v993, 0
        %1040 = vmatprep.subr.mxu0 0.0
        %1041 = vmatpush1.msra.mxu0 %v900
        %1042 = vmatprep.subr.mxu0 0.0
        %1043 = vmatpush1.msra.mxu0 0.0
        %1044 = vmatprep.subr.mxu0 0.0
        %1045 = vmatpush1.msra.mxu0 0.0
        %1046 = vmatprep.subr.mxu0 0.0
        %1047 = vmatpush1.msra.mxu0 0.0
        %1048 = vmatprep.subr.mxu0 0.0
        %1049 = vmatpush1.msra.mxu0 0.0
        %1050 = vmatprep.subr.mxu0 0.0
        %1051 = vmatpush1.msra.mxu0 0.0
        %1052 = vmatprep.subr.mxu0 0.0
        %1053 = vmatpush1.msra.mxu0 0.0
        %1054 = vmatprep.subr.mxu0 0.0
        %1055 = vmatpush1.msra.mxu0 0.0
        %1056 = vmatprep.subr.mxu0 0.0
        %1057 = vmatpush1.msra.mxu0 0.0
        %1058 = vmatprep.subr.mxu0 0.0
        %1059 = vmatpush1.msra.mxu0 0.0
        %1060 = vmatprep.subr.mxu0 0.0
        %1061 = vmatpush1.msra.mxu0 0.0
        %1062 = vmatprep.subr.mxu0 0.0
        %1063 = vmatpush1.msra.mxu0 0.0
        %1064 = vmatprep.subr.mxu0 0.0
        %1065 = vmatpush1.msra.mxu0 0.0
        %1066 = vmatprep.subr.mxu0 0.0
        %1067 = vmatpush1.msra.mxu0 0.0
        %1068 = vmatprep.subr.mxu0 0.0
        %1069 = vmatpush1.msra.mxu0 0.0
        %1070 = vmatprep.subr.mxu0 0.0
        %1071 = vmatpush1.msra.mxu0 0.0
        %1072 = vmatprep.subr.mxu0 0.0
        %1073 = vmatpush1.msra.mxu0 0.0
        %1074 = vmatprep.subr.mxu0 0.0
        %1075 = vmatpush1.msra.mxu0 0.0
        %1076 = vmatprep.subr.mxu0 0.0
        %1077 = vmatpush1.msra.mxu0 0.0
        %1078 = vmatprep.subr.mxu0 0.0
        %1079 = vmatpush1.msra.mxu0 0.0
        %1080 = vmatprep.subr.mxu0 0.0
        %1081 = vmatpush1.msra.mxu0 0.0
        %1082 = vmatprep.subr.mxu0 0.0
        %1083 = vmatpush1.msra.mxu0 0.0
        %1084 = vmatprep.subr.mxu0 0.0
        %1085 = vmatpush1.msra.mxu0 0.0
        %1086 = vmatprep.subr.mxu0 0.0
        %1087 = vmatpush1.msra.mxu0 0.0
        %1088 = vmatprep.subr.mxu0 0.0
        %1089 = vmatpush1.msra.mxu0 0.0
        %1090 = vmatprep.subr.mxu0 0.0
        %1091 = vmatpush1.msra.mxu0 0.0
        %1092 = vmatprep.subr.mxu0 0.0
        %1093 = vmatpush1.msra.mxu0 0.0
        %1094 = vmatprep.subr.mxu0 0.0
        %1095 = vmatpush1.msra.mxu0 0.0
        %1096 = vmatprep.subr.mxu0 0.0
        %1097 = vmatpush1.msra.mxu0 0.0
        %1098 = vmatprep.subr.mxu0 0.0
        %1099 = vmatpush1.msra.mxu0 0.0
        %1100 = vmatprep.subr.mxu0 0.0
        %1101 = vmatpush1.msra.mxu0 0.0
        %1102 = vmatprep.subr.mxu0 0.0
        %1103 = vmatpush1.msra.mxu0 0.0
        %1104 = vmatprep.mubr.f32.mxu0 0.0
        %1105 = vmatmul.mubr.f32.gmra.mrb[0].mxu0 %v1038
        %v1106 = vpop.f32.mrb[0].mxu0
        %v1107 = vadd.f32 0.0, %v1106
        %v1108 = vpop.f32.mrb[0].mxu0
        %1109 = vdwg.mxu0
        %v1111 = vsel %vm982, %v1036, 0
        %1113 = vmatprep.subr.mxu0 0.0
        %1114 = vmatpush1.msra.mxu0 %v830
        %1115 = vmatprep.subr.mxu0 0.0
        %1116 = vmatpush1.msra.mxu0 0.0
        %1117 = vmatprep.subr.mxu0 0.0
        %1118 = vmatpush1.msra.mxu0 0.0
        %1119 = vmatprep.subr.mxu0 0.0
        %1120 = vmatpush1.msra.mxu0 0.0
        %1121 = vmatprep.subr.mxu0 0.0
        %1122 = vmatpush1.msra.mxu0 0.0
        %1123 = vmatprep.subr.mxu0 0.0
        %1124 = vmatpush1.msra.mxu0 0.0
        %1125 = vmatprep.subr.mxu0 0.0
        %1126 = vmatpush1.msra.mxu0 0.0
        %1127 = vmatprep.subr.mxu0 0.0
        %1128 = vmatpush1.msra.mxu0 0.0
        %1129 = vmatprep.subr.mxu0 0.0
        %1130 = vmatpush1.msra.mxu0 0.0
        %1131 = vmatprep.subr.mxu0 0.0
        %1132 = vmatpush1.msra.mxu0 0.0
        %1133 = vmatprep.subr.mxu0 0.0
        %1134 = vmatpush1.msra.mxu0 0.0
        %1135 = vmatprep.subr.mxu0 0.0
        %1136 = vmatpush1.msra.mxu0 0.0
        %1137 = vmatprep.subr.mxu0 0.0
        %1138 = vmatpush1.msra.mxu0 0.0
        %1139 = vmatprep.subr.mxu0 0.0
        %1140 = vmatpush1.msra.mxu0 0.0
        %1141 = vmatprep.subr.mxu0 0.0
        %1142 = vmatpush1.msra.mxu0 0.0
        %1143 = vmatprep.subr.mxu0 0.0
        %1144 = vmatpush1.msra.mxu0 0.0
        %1145 = vmatprep.subr.mxu0 0.0
        %1146 = vmatpush1.msra.mxu0 0.0
        %1147 = vmatprep.subr.mxu0 0.0
        %1148 = vmatpush1.msra.mxu0 0.0
        %1149 = vmatprep.subr.mxu0 0.0
        %1150 = vmatpush1.msra.mxu0 0.0
        %1151 = vmatprep.subr.mxu0 0.0
        %1152 = vmatpush1.msra.mxu0 0.0
        %1153 = vmatprep.subr.mxu0 0.0
        %1154 = vmatpush1.msra.mxu0 0.0
        %1155 = vmatprep.subr.mxu0 0.0
        %1156 = vmatpush1.msra.mxu0 0.0
        %1157 = vmatprep.subr.mxu0 0.0
        %1158 = vmatpush1.msra.mxu0 0.0
        %1159 = vmatprep.subr.mxu0 0.0
        %1160 = vmatpush1.msra.mxu0 0.0
        %1161 = vmatprep.subr.mxu0 0.0
        %1162 = vmatpush1.msra.mxu0 0.0
        %1163 = vmatprep.subr.mxu0 0.0
        %1164 = vmatpush1.msra.mxu0 0.0
        %1165 = vmatprep.subr.mxu0 0.0
        %1166 = vmatpush1.msra.mxu0 0.0
        %1167 = vmatprep.subr.mxu0 0.0
        %1168 = vmatpush1.msra.mxu0 0.0
        %1169 = vmatprep.subr.mxu0 0.0
        %1170 = vmatpush1.msra.mxu0 0.0
        %1171 = vmatprep.subr.mxu0 0.0
        %1172 = vmatpush1.msra.mxu0 0.0
        %1173 = vmatprep.subr.mxu0 0.0
        %1174 = vmatpush1.msra.mxu0 0.0
        %1175 = vmatprep.subr.mxu0 0.0
        %1176 = vmatpush1.msra.mxu0 0.0
        %1177 = vmatprep.mubr.f32.mxu0 0.0
        %1178 = vmatmul.mubr.f32.gmra.mrb[0].mxu0 %v1111
        %v1179 = vpop.f32.mrb[0].mxu0
        %v1180 = vadd.f32 0.0, %v1179
        %v1181 = vpop.f32.mrb[0].mxu0
        %1182 = vdwg.mxu0
        %1183 = vrot.lane.b32.xlu0 %v903, 112
        %v1184 = vpop.permute.xlu0 %1183
        %1185 = vrot.lane.b32.xlu0 %v904, 112
        %v1186 = vpop.permute.xlu0 %1185
        %v1187 = vsel %vm905, %v1184, 0
        %v1189 = vsel %vm905, %v1186, 0
        %1191 = vmatprep.subr.mxu0 0.0
        %1192 = vmatpush1.xpose.msra.mxu0 %v1189
        %1193 = vmatprep.subr.mxu0 0.0
        %1194 = vmatpush1.xpose.msra.mxu0 0.0
        %1195 = vmatprep.subr.mxu0 0.0
        %1196 = vmatpush1.xpose.msra.mxu0 0.0
        %1197 = vmatprep.subr.mxu0 0.0
        %1198 = vmatpush1.xpose.msra.mxu0 0.0
        %1199 = vmatprep.subr.mxu0 0.0
        %1200 = vmatpush1.xpose.msra.mxu0 0.0
        %1201 = vmatprep.subr.mxu0 0.0
        %1202 = vmatpush1.xpose.msra.mxu0 0.0
        %1203 = vmatprep.subr.mxu0 0.0
        %1204 = vmatpush1.xpose.msra.mxu0 0.0
        %1205 = vmatprep.subr.mxu0 0.0
        %1206 = vmatpush1.xpose.msra.mxu0 0.0
        %1207 = vmatprep.subr.mxu0 0.0
        %1208 = vmatpush1.xpose.msra.mxu0 0.0
        %1209 = vmatprep.subr.mxu0 0.0
        %1210 = vmatpush1.xpose.msra.mxu0 0.0
        %1211 = vmatprep.subr.mxu0 0.0
        %1212 = vmatpush1.xpose.msra.mxu0 0.0
        %1213 = vmatprep.subr.mxu0 0.0
        %1214 = vmatpush1.xpose.msra.mxu0 0.0
        %1215 = vmatprep.subr.mxu0 0.0
        %1216 = vmatpush1.xpose.msra.mxu0 0.0
        %1217 = vmatprep.subr.mxu0 0.0
        %1218 = vmatpush1.xpose.msra.mxu0 0.0
        %1219 = vmatprep.subr.mxu0 0.0
        %1220 = vmatpush1.xpose.msra.mxu0 0.0
        %1221 = vmatprep.subr.mxu0 0.0
        %1222 = vmatpush1.xpose.msra.mxu0 0.0
        %1223 = vmatprep.subr.mxu0 0.0
        %1224 = vmatpush1.xpose.msra.mxu0 0.0
        %1225 = vmatprep.subr.mxu0 0.0
        %1226 = vmatpush1.xpose.msra.mxu0 0.0
        %1227 = vmatprep.subr.mxu0 0.0
        %1228 = vmatpush1.xpose.msra.mxu0 0.0
        %1229 = vmatprep.subr.mxu0 0.0
        %1230 = vmatpush1.xpose.msra.mxu0 0.0
        %1231 = vmatprep.subr.mxu0 0.0
        %1232 = vmatpush1.xpose.msra.mxu0 0.0
        %1233 = vmatprep.subr.mxu0 0.0
        %1234 = vmatpush1.xpose.msra.mxu0 0.0
        %1235 = vmatprep.subr.mxu0 0.0
        %1236 = vmatpush1.xpose.msra.mxu0 0.0
        %1237 = vmatprep.subr.mxu0 0.0
        %1238 = vmatpush1.xpose.msra.mxu0 0.0
        %1239 = vmatprep.subr.mxu0 0.0
        %1240 = vmatpush1.xpose.msra.mxu0 0.0
        %1241 = vmatprep.subr.mxu0 0.0
        %1242 = vmatpush1.xpose.msra.mxu0 0.0
        %1243 = vmatprep.subr.mxu0 0.0
        %1244 = vmatpush1.xpose.msra.mxu0 0.0
        %1245 = vmatprep.subr.mxu0 0.0
        %1246 = vmatpush1.xpose.msra.mxu0 0.0
        %1247 = vmatprep.subr.mxu0 0.0
        %1248 = vmatpush1.xpose.msra.mxu0 0.0
        %1249 = vmatprep.subr.mxu0 0.0
        %1250 = vmatpush1.xpose.msra.mxu0 0.0
        %1251 = vmatprep.subr.mxu0 0.0
        %1252 = vmatpush1.xpose.msra.mxu0 0.0
        %1253 = vmatprep.subr.mxu0 0.0
        %1254 = vmatpush1.xpose.msra.mxu0 0.0
        %1255 = vmatprep.mubr.f32.mxu0 0.0
        %1256 = vmatmul.mubr.f32.gmra.mrb[0].mxu0 %v1187
        %v1257 = vpop.f32.mrb[0].mxu0
        %v1258 = vadd.f32 0.0, %v1257
        %v1259 = vpop.f32.mrb[0].mxu0
        %1260 = vdwg.mxu0
        %v1261 = vsel %vm982, %v1258, -inf
        %1262 = vmax.xlane.f32.xlu0 %v1261
        %v1263 = vpop.xlane.xlu0 %1262
        %v1264 = vsub.f32 %v1258, %v1263
        %v1265 = vmul.f32 %v1264, 1.442695
        %v1266 = vpow.pop %v1265
        %v1267 = vsel %vm982, %v1266, 0.0
        %1268 = vadd.xlane.f32.xlu0 %v1267
        %v1269 = vpop.xlane.xlu0 %1268
        %v1270 = vrcp.pop %v1269
        %v1271 = vmul.f32 %v1266, %v1270
        %1272 = vxpose.xlu0.b32.start [1/16] %v1258, 128
        %1273 = vxpose.xlu0.b32.cont [2/16] 0.0, 128
        %1274 = vxpose.xlu0.b32.cont [3/16] 0.0, 128
        %1275 = vxpose.xlu0.b32.cont [4/16] 0.0, 128
        %1276 = vxpose.xlu0.b32.cont [5/16] 0.0, 128
        %1277 = vxpose.xlu0.b32.cont [6/16] 0.0, 128
        %1278 = vxpose.xlu0.b32.cont [7/16] 0.0, 128
        %1279 = vxpose.xlu0.b32.cont [8/16] 0.0, 128
        %1280 = vxpose.xlu0.b32.cont [9/16] 0.0, 128
        %1281 = vxpose.xlu0.b32.cont [10/16] 0.0, 128
        %1282 = vxpose.xlu0.b32.cont [11/16] 0.0, 128
        %1283 = vxpose.xlu0.b32.cont [12/16] 0.0, 128
        %1284 = vxpose.xlu0.b32.cont [13/16] 0.0, 128
        %1285 = vxpose.xlu0.b32.cont [14/16] 0.0, 128
        %1286 = vxpose.xlu0.b32.cont [15/16] 0.0, 128
        %1287 = vxpose.xlu0.b32.end [16/16] 0.0, 128
        %v1288 = vpop.trf.xlu0
        %v1289 = vpop.trf.xlu0
        %v1290 = vpop.trf.xlu0
        %v1291 = vpop.trf.xlu0
        %v1292 = vpop.trf.xlu0
        %v1293 = vpop.trf.xlu0
        %v1294 = vpop.trf.xlu0
        %v1295 = vpop.trf.xlu0
        %v1296 = vpop.trf.xlu0
        %v1297 = vpop.trf.xlu0
        %v1298 = vpop.trf.xlu0
        %v1299 = vpop.trf.xlu0
        %v1300 = vpop.trf.xlu0
        %v1301 = vpop.trf.xlu0
        %v1302 = vpop.trf.xlu0
        %v1303 = vpop.trf.xlu0
        %v1304 = vsel %vm982, %v1288, -inf
        %1305 = vmax.xlane.f32.xlu0 %v1304
        %v1306 = vpop.xlane.xlu0 %1305
        %v1307 = vsub.f32 %v1288, %v1306
        %v1308 = vmul.f32 %v1307, 1.442695
        %v1309 = vpow.pop %v1308
        %v1310 = vsel %vm982, %v1309, 0.0
        %1311 = vadd.xlane.f32.xlu0 %v1310
        %v1312 = vpop.xlane.xlu0 %1311
        %v1313 = vrcp.pop %v1312
        %v1314 = vmul.f32 %v1309, %v1313
        %1316 = vrot.lane.b32.xlu0 %v900, 112
        %v1317 = vpop.permute.xlu0 %1316
        %v1320 = vsel %vm982, %v1271, 0
        %1322 = vmatprep.subr.mxu0 0.0
        %1323 = vmatpush1.msra.mxu0 %v1317
        %1324 = vmatprep.subr.mxu0 0.0
        %1325 = vmatpush1.msra.mxu0 0.0
        %1326 = vmatprep.subr.mxu0 0.0
        %1327 = vmatpush1.msra.mxu0 0.0
        %1328 = vmatprep.subr.mxu0 0.0
        %1329 = vmatpush1.msra.mxu0 0.0
        %1330 = vmatprep.subr.mxu0 0.0
        %1331 = vmatpush1.msra.mxu0 0.0
        %1332 = vmatprep.subr.mxu0 0.0
        %1333 = vmatpush1.msra.mxu0 0.0
        %1334 = vmatprep.subr.mxu0 0.0
        %1335 = vmatpush1.msra.mxu0 0.0
        %1336 = vmatprep.subr.mxu0 0.0
        %1337 = vmatpush1.msra.mxu0 0.0
        %1338 = vmatprep.subr.mxu0 0.0
        %1339 = vmatpush1.msra.mxu0 0.0
        %1340 = vmatprep.subr.mxu0 0.0
        %1341 = vmatpush1.msra.mxu0 0.0
        %1342 = vmatprep.subr.mxu0 0.0
        %1343 = vmatpush1.msra.mxu0 0.0
        %1344 = vmatprep.subr.mxu0 0.0
        %1345 = vmatpush1.msra.mxu0 0.0
        %1346 = vmatprep.subr.mxu0 0.0
        %1347 = vmatpush1.msra.mxu0 0.0
        %1348 = vmatprep.subr.mxu0 0.0
        %1349 = vmatpush1.msra.mxu0 0.0
        %1350 = vmatprep.subr.mxu0 0.0
        %1351 = vmatpush1.msra.mxu0 0.0
        %1352 = vmatprep.subr.mxu0 0.0
        %1353 = vmatpush1.msra.mxu0 0.0
        %1354 = vmatprep.subr.mxu0 0.0
        %1355 = vmatpush1.msra.mxu0 0.0
        %1356 = vmatprep.subr.mxu0 0.0
        %1357 = vmatpush1.msra.mxu0 0.0
        %1358 = vmatprep.subr.mxu0 0.0
        %1359 = vmatpush1.msra.mxu0 0.0
        %1360 = vmatprep.subr.mxu0 0.0
        %1361 = vmatpush1.msra.mxu0 0.0
        %1362 = vmatprep.subr.mxu0 0.0
        %1363 = vmatpush1.msra.mxu0 0.0
        %1364 = vmatprep.subr.mxu0 0.0
        %1365 = vmatpush1.msra.mxu0 0.0
        %1366 = vmatprep.subr.mxu0 0.0
        %1367 = vmatpush1.msra.mxu0 0.0
        %1368 = vmatprep.subr.mxu0 0.0
        %1369 = vmatpush1.msra.mxu0 0.0
        %1370 = vmatprep.subr.mxu0 0.0
        %1371 = vmatpush1.msra.mxu0 0.0
        %1372 = vmatprep.subr.mxu0 0.0
        %1373 = vmatpush1.msra.mxu0 0.0
        %1374 = vmatprep.subr.mxu0 0.0
        %1375 = vmatpush1.msra.mxu0 0.0
        %1376 = vmatprep.subr.mxu0 0.0
        %1377 = vmatpush1.msra.mxu0 0.0
        %1378 = vmatprep.subr.mxu0 0.0
        %1379 = vmatpush1.msra.mxu0 0.0
        %1380 = vmatprep.subr.mxu0 0.0
        %1381 = vmatpush1.msra.mxu0 0.0
        %1382 = vmatprep.subr.mxu0 0.0
        %1383 = vmatpush1.msra.mxu0 0.0
        %1384 = vmatprep.subr.mxu0 0.0
        %1385 = vmatpush1.msra.mxu0 0.0
        %1386 = vmatprep.mubr.f32.mxu0 0.0
        %1387 = vmatmul.mubr.f32.gmra.mrb[0].mxu0 %v1320
        %v1388 = vpop.f32.mrb[0].mxu0
        %v1389 = vadd.f32 0.0, %v1388
        %v1390 = vpop.f32.mrb[0].mxu0
        %1391 = vdwg.mxu0
        %1393 = vrot.lane.b32.xlu0 %v830, 112
        %v1394 = vpop.permute.xlu0 %1393
        %v1397 = vsel %vm982, %v1314, 0
        %1399 = vmatprep.subr.mxu0 0.0
        %1400 = vmatpush1.msra.mxu0 %v1394
        %1401 = vmatprep.subr.mxu0 0.0
        %1402 = vmatpush1.msra.mxu0 0.0
        %1403 = vmatprep.subr.mxu0 0.0
        %1404 = vmatpush1.msra.mxu0 0.0
        %1405 = vmatprep.subr.mxu0 0.0
        %1406 = vmatpush1.msra.mxu0 0.0
        %1407 = vmatprep.subr.mxu0 0.0
        %1408 = vmatpush1.msra.mxu0 0.0
        %1409 = vmatprep.subr.mxu0 0.0
        %1410 = vmatpush1.msra.mxu0 0.0
        %1411 = vmatprep.subr.mxu0 0.0
        %1412 = vmatpush1.msra.mxu0 0.0
        %1413 = vmatprep.subr.mxu0 0.0
        %1414 = vmatpush1.msra.mxu0 0.0
        %1415 = vmatprep.subr.mxu0 0.0
        %1416 = vmatpush1.msra.mxu0 0.0
        %1417 = vmatprep.subr.mxu0 0.0
        %1418 = vmatpush1.msra.mxu0 0.0
        %1419 = vmatprep.subr.mxu0 0.0
        %1420 = vmatpush1.msra.mxu0 0.0
        %1421 = vmatprep.subr.mxu0 0.0
        %1422 = vmatpush1.msra.mxu0 0.0
        %1423 = vmatprep.subr.mxu0 0.0
        %1424 = vmatpush1.msra.mxu0 0.0
        %1425 = vmatprep.subr.mxu0 0.0
        %1426 = vmatpush1.msra.mxu0 0.0
        %1427 = vmatprep.subr.mxu0 0.0
        %1428 = vmatpush1.msra.mxu0 0.0
        %1429 = vmatprep.subr.mxu0 0.0
        %1430 = vmatpush1.msra.mxu0 0.0
        %1431 = vmatprep.subr.mxu0 0.0
        %1432 = vmatpush1.msra.mxu0 0.0
        %1433 = vmatprep.subr.mxu0 0.0
        %1434 = vmatpush1.msra.mxu0 0.0
        %1435 = vmatprep.subr.mxu0 0.0
        %1436 = vmatpush1.msra.mxu0 0.0
        %1437 = vmatprep.subr.mxu0 0.0
        %1438 = vmatpush1.msra.mxu0 0.0
        %1439 = vmatprep.subr.mxu0 0.0
        %1440 = vmatpush1.msra.mxu0 0.0
        %1441 = vmatprep.subr.mxu0 0.0
        %1442 = vmatpush1.msra.mxu0 0.0
        %1443 = vmatprep.subr.mxu0 0.0
        %1444 = vmatpush1.msra.mxu0 0.0
        %1445 = vmatprep.subr.mxu0 0.0
        %1446 = vmatpush1.msra.mxu0 0.0
        %1447 = vmatprep.subr.mxu0 0.0
        %1448 = vmatpush1.msra.mxu0 0.0
        %1449 = vmatprep.subr.mxu0 0.0
        %1450 = vmatpush1.msra.mxu0 0.0
        %1451 = vmatprep.subr.mxu0 0.0
        %1452 = vmatpush1.msra.mxu0 0.0
        %1453 = vmatprep.subr.mxu0 0.0
        %1454 = vmatpush1.msra.mxu0 0.0
        %1455 = vmatprep.subr.mxu0 0.0
        %1456 = vmatpush1.msra.mxu0 0.0
        %1457 = vmatprep.subr.mxu0 0.0
        %1458 = vmatpush1.msra.mxu0 0.0
        %1459 = vmatprep.subr.mxu0 0.0
        %1460 = vmatpush1.msra.mxu0 0.0
        %1461 = vmatprep.subr.mxu0 0.0
        %1462 = vmatpush1.msra.mxu0 0.0
        %1463 = vmatprep.mubr.f32.mxu0 0.0
        %1464 = vmatmul.mubr.f32.gmra.mrb[0].mxu0 %v1397
        %v1465 = vpop.f32.mrb[0].mxu0
        %v1466 = vadd.f32 0.0, %v1465
        %v1467 = vpop.f32.mrb[0].mxu0
        %1468 = vdwg.mxu0
        %v1470 = vsel %vm905, %v1389, 0
        %1472 = vmatprep.subr.mxu0 0.0
        %1473 = vmatpush1.msra.mxu0 %v599
        %1474 = vmatprep.subr.mxu0 0.0
        %1475 = vmatpush1.msra.mxu0 %v600
        %1476 = vmatprep.subr.mxu0 0.0
        %1477 = vmatpush1.msra.mxu0 0.0
        %1478 = vmatprep.subr.mxu0 0.0
        %1479 = vmatpush1.msra.mxu0 0.0
        %1480 = vmatprep.subr.mxu0 0.0
        %1481 = vmatpush1.msra.mxu0 0.0
        %1482 = vmatprep.subr.mxu0 0.0
        %1483 = vmatpush1.msra.mxu0 0.0
        %1484 = vmatprep.subr.mxu0 0.0
        %1485 = vmatpush1.msra.mxu0 0.0
        %1486 = vmatprep.subr.mxu0 0.0
        %1487 = vmatpush1.msra.mxu0 0.0
        %1488 = vmatprep.subr.mxu0 0.0
        %1489 = vmatpush1.msra.mxu0 0.0
        %1490 = vmatprep.subr.mxu0 0.0
        %1491 = vmatpush1.msra.mxu0 0.0
        %1492 = vmatprep.subr.mxu0 0.0
        %1493 = vmatpush1.msra.mxu0 0.0
        %1494 = vmatprep.subr.mxu0 0.0
        %1495 = vmatpush1.msra.mxu0 0.0
        %1496 = vmatprep.subr.mxu0 0.0
        %1497 = vmatpush1.msra.mxu0 0.0
        %1498 = vmatprep.subr.mxu0 0.0
        %1499 = vmatpush1.msra.mxu0 0.0
        %1500 = vmatprep.subr.mxu0 0.0
        %1501 = vmatpush1.msra.mxu0 0.0
        %1502 = vmatprep.subr.mxu0 0.0
        %1503 = vmatpush1.msra.mxu0 0.0
        %1504 = vmatprep.subr.mxu0 0.0
        %1505 = vmatpush1.msra.mxu0 0.0
        %1506 = vmatprep.subr.mxu0 0.0
        %1507 = vmatpush1.msra.mxu0 0.0
        %1508 = vmatprep.subr.mxu0 0.0
        %1509 = vmatpush1.msra.mxu0 0.0
        %1510 = vmatprep.subr.mxu0 0.0
        %1511 = vmatpush1.msra.mxu0 0.0
        %1512 = vmatprep.subr.mxu0 0.0
        %1513 = vmatpush1.msra.mxu0 0.0
        %1514 = vmatprep.subr.mxu0 0.0
        %1515 = vmatpush1.msra.mxu0 0.0
        %1516 = vmatprep.subr.mxu0 0.0
        %1517 = vmatpush1.msra.mxu0 0.0
        %1518 = vmatprep.subr.mxu0 0.0
        %1519 = vmatpush1.msra.mxu0 0.0
        %1520 = vmatprep.subr.mxu0 0.0
        %1521 = vmatpush1.msra.mxu0 0.0
        %1522 = vmatprep.subr.mxu0 0.0
        %1523 = vmatpush1.msra.mxu0 0.0
        %1524 = vmatprep.subr.mxu0 0.0
        %1525 = vmatpush1.msra.mxu0 0.0
        %1526 = vmatprep.subr.mxu0 0.0
        %1527 = vmatpush1.msra.mxu0 0.0
        %1528 = vmatprep.subr.mxu0 0.0
        %1529 = vmatpush1.msra.mxu0 0.0
        %1530 = vmatprep.subr.mxu0 0.0
        %1531 = vmatpush1.msra.mxu0 0.0
        %1532 = vmatprep.subr.mxu0 0.0
        %1533 = vmatpush1.msra.mxu0 0.0
        %1534 = vmatprep.subr.mxu0 0.0
        %1535 = vmatpush1.msra.mxu0 0.0
        %1536 = vmatprep.mubr.f32.mxu0 0.0
        %1537 = vmatmul.mubr.f32.gmra.mrb[0].mxu0 %v1470
        %v1538 = vpop.f32.mrb[0].mxu0
        %v1539 = vadd.f32 0.0, %v1538
        %v1540 = vpop.f32.mrb[0].mxu0
        %1541 = vdwg.mxu0
        %v1543 = vsel %vm905, %v1107, 0
        %1545 = vmatprep.subr.mxu0 0.0
        %1546 = vmatpush1.msra.mxu0 %v597
        %1547 = vmatprep.subr.mxu0 0.0
        %1548 = vmatpush1.msra.mxu0 %v598
        %1549 = vmatprep.subr.mxu0 0.0
        %1550 = vmatpush1.msra.mxu0 0.0
        %1551 = vmatprep.subr.mxu0 0.0
        %1552 = vmatpush1.msra.mxu0 0.0
        %1553 = vmatprep.subr.mxu0 0.0
        %1554 = vmatpush1.msra.mxu0 0.0
        %1555 = vmatprep.subr.mxu0 0.0
        %1556 = vmatpush1.msra.mxu0 0.0
        %1557 = vmatprep.subr.mxu0 0.0
        %1558 = vmatpush1.msra.mxu0 0.0
        %1559 = vmatprep.subr.mxu0 0.0
        %1560 = vmatpush1.msra.mxu0 0.0
        %1561 = vmatprep.subr.mxu0 0.0
        %1562 = vmatpush1.msra.mxu0 0.0
        %1563 = vmatprep.subr.mxu0 0.0
        %1564 = vmatpush1.msra.mxu0 0.0
        %1565 = vmatprep.subr.mxu0 0.0
        %1566 = vmatpush1.msra.mxu0 0.0
        %1567 = vmatprep.subr.mxu0 0.0
        %1568 = vmatpush1.msra.mxu0 0.0
        %1569 = vmatprep.subr.mxu0 0.0
        %1570 = vmatpush1.msra.mxu0 0.0
        %1571 = vmatprep.subr.mxu0 0.0
        %1572 = vmatpush1.msra.mxu0 0.0
        %1573 = vmatprep.subr.mxu0 0.0
        %1574 = vmatpush1.msra.mxu0 0.0
        %1575 = vmatprep.subr.mxu0 0.0
        %1576 = vmatpush1.msra.mxu0 0.0
        %1577 = vmatprep.subr.mxu0 0.0
        %1578 = vmatpush1.msra.mxu0 0.0
        %1579 = vmatprep.subr.mxu0 0.0
        %1580 = vmatpush1.msra.mxu0 0.0
        %1581 = vmatprep.subr.mxu0 0.0
        %1582 = vmatpush1.msra.mxu0 0.0
        %1583 = vmatprep.subr.mxu0 0.0
        %1584 = vmatpush1.msra.mxu0 0.0
        %1585 = vmatprep.subr.mxu0 0.0
        %1586 = vmatpush1.msra.mxu0 0.0
        %1587 = vmatprep.subr.mxu0 0.0
        %1588 = vmatpush1.msra.mxu0 0.0
        %1589 = vmatprep.subr.mxu0 0.0
        %1590 = vmatpush1.msra.mxu0 0.0
        %1591 = vmatprep.subr.mxu0 0.0
        %1592 = vmatpush1.msra.mxu0 0.0
        %1593 = vmatprep.subr.mxu0 0.0
        %1594 = vmatpush1.msra.mxu0 0.0
        %1595 = vmatprep.subr.mxu0 0.0
        %1596 = vmatpush1.msra.mxu0 0.0
        %1597 = vmatprep.subr.mxu0 0.0
        %1598 = vmatpush1.msra.mxu0 0.0
        %1599 = vmatprep.subr.mxu0 0.0
        %1600 = vmatpush1.msra.mxu0 0.0
        %1601 = vmatprep.subr.mxu0 0.0
        %1602 = vmatpush1.msra.mxu0 0.0
        %1603 = vmatprep.subr.mxu0 0.0
        %1604 = vmatpush1.msra.mxu0 0.0
        %1605 = vmatprep.subr.mxu0 0.0
        %1606 = vmatpush1.msra.mxu0 0.0
        %1607 = vmatprep.subr.mxu0 0.0
        %1608 = vmatpush1.msra.mxu0 0.0
        %1609 = vmatprep.mubr.f32.mxu0 0.0
        %1610 = vmatmul.mubr.f32.gmra.mrb[0].mxu0 %v1543
        %v1611 = vpop.f32.mrb[0].mxu0
        %v1612 = vadd.f32 %v1539, %v1611
        %v1613 = vpop.f32.mrb[0].mxu0
        %1614 = vdwg.mxu0
        %v1616 = vsel %vm905, %v1466, 0
        %1618 = vmatprep.subr.mxu0 0.0
        %1619 = vmatpush1.msra.mxu0 %v599
        %1620 = vmatprep.subr.mxu0 0.0
        %1621 = vmatpush1.msra.mxu0 %v600
        %1622 = vmatprep.subr.mxu0 0.0
        %1623 = vmatpush1.msra.mxu0 0.0
        %1624 = vmatprep.subr.mxu0 0.0
        %1625 = vmatpush1.msra.mxu0 0.0
        %1626 = vmatprep.subr.mxu0 0.0
        %1627 = vmatpush1.msra.mxu0 0.0
        %1628 = vmatprep.subr.mxu0 0.0
        %1629 = vmatpush1.msra.mxu0 0.0
        %1630 = vmatprep.subr.mxu0 0.0
        %1631 = vmatpush1.msra.mxu0 0.0
        %1632 = vmatprep.subr.mxu0 0.0
        %1633 = vmatpush1.msra.mxu0 0.0
        %1634 = vmatprep.subr.mxu0 0.0
        %1635 = vmatpush1.msra.mxu0 0.0
        %1636 = vmatprep.subr.mxu0 0.0
        %1637 = vmatpush1.msra.mxu0 0.0
        %1638 = vmatprep.subr.mxu0 0.0
        %1639 = vmatpush1.msra.mxu0 0.0
        %1640 = vmatprep.subr.mxu0 0.0
        %1641 = vmatpush1.msra.mxu0 0.0
        %1642 = vmatprep.subr.mxu0 0.0
        %1643 = vmatpush1.msra.mxu0 0.0
        %1644 = vmatprep.subr.mxu0 0.0
        %1645 = vmatpush1.msra.mxu0 0.0
        %1646 = vmatprep.subr.mxu0 0.0
        %1647 = vmatpush1.msra.mxu0 0.0
        %1648 = vmatprep.subr.mxu0 0.0
        %1649 = vmatpush1.msra.mxu0 0.0
        %1650 = vmatprep.subr.mxu0 0.0
        %1651 = vmatpush1.msra.mxu0 0.0
        %1652 = vmatprep.subr.mxu0 0.0
        %1653 = vmatpush1.msra.mxu0 0.0
        %1654 = vmatprep.subr.mxu0 0.0
        %1655 = vmatpush1.msra.mxu0 0.0
        %1656 = vmatprep.subr.mxu0 0.0
        %1657 = vmatpush1.msra.mxu0 0.0
        %1658 = vmatprep.subr.mxu0 0.0
        %1659 = vmatpush1.msra.mxu0 0.0
        %1660 = vmatprep.subr.mxu0 0.0
        %1661 = vmatpush1.msra.mxu0 0.0
        %1662 = vmatprep.subr.mxu0 0.0
        %1663 = vmatpush1.msra.mxu0 0.0
        %1664 = vmatprep.subr.mxu0 0.0
        %1665 = vmatpush1.msra.mxu0 0.0
        %1666 = vmatprep.subr.mxu0 0.0
        %1667 = vmatpush1.msra.mxu0 0.0
        %1668 = vmatprep.subr.mxu0 0.0
        %1669 = vmatpush1.msra.mxu0 0.0
        %1670 = vmatprep.subr.mxu0 0.0
        %1671 = vmatpush1.msra.mxu0 0.0
        %1672 = vmatprep.subr.mxu0 0.0
        %1673 = vmatpush1.msra.mxu0 0.0
        %1674 = vmatprep.subr.mxu0 0.0
        %1675 = vmatpush1.msra.mxu0 0.0
        %1676 = vmatprep.subr.mxu0 0.0
        %1677 = vmatpush1.msra.mxu0 0.0
        %1678 = vmatprep.subr.mxu0 0.0
        %1679 = vmatpush1.msra.mxu0 0.0
        %1680 = vmatprep.subr.mxu0 0.0
        %1681 = vmatpush1.msra.mxu0 0.0
        %1682 = vmatprep.mubr.f32.mxu0 0.0
        %1683 = vmatmul.mubr.f32.gmra.mrb[0].mxu0 %v1616
        %v1684 = vpop.f32.mrb[0].mxu0
        %v1685 = vadd.f32 0.0, %v1684
        %v1686 = vpop.f32.mrb[0].mxu0
        %1687 = vdwg.mxu0
        %v1689 = vsel %vm905, %v1180, 0
        %1691 = vmatprep.subr.mxu0 0.0
        %1692 = vmatpush1.msra.mxu0 %v597
        %1693 = vmatprep.subr.mxu0 0.0
        %1694 = vmatpush1.msra.mxu0 %v598
        %1695 = vmatprep.subr.mxu0 0.0
        %1696 = vmatpush1.msra.mxu0 0.0
        %1697 = vmatprep.subr.mxu0 0.0
        %1698 = vmatpush1.msra.mxu0 0.0
        %1699 = vmatprep.subr.mxu0 0.0
        %1700 = vmatpush1.msra.mxu0 0.0
        %1701 = vmatprep.subr.mxu0 0.0
        %1702 = vmatpush1.msra.mxu0 0.0
        %1703 = vmatprep.subr.mxu0 0.0
        %1704 = vmatpush1.msra.mxu0 0.0
        %1705 = vmatprep.subr.mxu0 0.0
        %1706 = vmatpush1.msra.mxu0 0.0
        %1707 = vmatprep.subr.mxu0 0.0
        %1708 = vmatpush1.msra.mxu0 0.0
        %1709 = vmatprep.subr.mxu0 0.0
        %1710 = vmatpush1.msra.mxu0 0.0
        %1711 = vmatprep.subr.mxu0 0.0
        %1712 = vmatpush1.msra.mxu0 0.0
        %1713 = vmatprep.subr.mxu0 0.0
        %1714 = vmatpush1.msra.mxu0 0.0
        %1715 = vmatprep.subr.mxu0 0.0
        %1716 = vmatpush1.msra.mxu0 0.0
        %1717 = vmatprep.subr.mxu0 0.0
        %1718 = vmatpush1.msra.mxu0 0.0
        %1719 = vmatprep.subr.mxu0 0.0
        %1720 = vmatpush1.msra.mxu0 0.0
        %1721 = vmatprep.subr.mxu0 0.0
        %1722 = vmatpush1.msra.mxu0 0.0
        %1723 = vmatprep.subr.mxu0 0.0
        %1724 = vmatpush1.msra.mxu0 0.0
        %1725 = vmatprep.subr.mxu0 0.0
        %1726 = vmatpush1.msra.mxu0 0.0
        %1727 = vmatprep.subr.mxu0 0.0
        %1728 = vmatpush1.msra.mxu0 0.0
        %1729 = vmatprep.subr.mxu0 0.0
        %1730 = vmatpush1.msra.mxu0 0.0
        %1731 = vmatprep.subr.mxu0 0.0
        %1732 = vmatpush1.msra.mxu0 0.0
        %1733 = vmatprep.subr.mxu0 0.0
        %1734 = vmatpush1.msra.mxu0 0.0
        %1735 = vmatprep.subr.mxu0 0.0
        %1736 = vmatpush1.msra.mxu0 0.0
        %1737 = vmatprep.subr.mxu0 0.0
        %1738 = vmatpush1.msra.mxu0 0.0
        %1739 = vmatprep.subr.mxu0 0.0
        %1740 = vmatpush1.msra.mxu0 0.0
        %1741 = vmatprep.subr.mxu0 0.0
        %1742 = vmatpush1.msra.mxu0 0.0
        %1743 = vmatprep.subr.mxu0 0.0
        %1744 = vmatpush1.msra.mxu0 0.0
        %1745 = vmatprep.subr.mxu0 0.0
        %1746 = vmatpush1.msra.mxu0 0.0
        %1747 = vmatprep.subr.mxu0 0.0
        %1748 = vmatpush1.msra.mxu0 0.0
        %1749 = vmatprep.subr.mxu0 0.0
        %1750 = vmatpush1.msra.mxu0 0.0
        %1751 = vmatprep.subr.mxu0 0.0
        %1752 = vmatpush1.msra.mxu0 0.0
        %1753 = vmatprep.subr.mxu0 0.0
        %1754 = vmatpush1.msra.mxu0 0.0
        %1755 = vmatprep.mubr.f32.mxu0 0.0
        %1756 = vmatmul.mubr.f32.gmra.mrb[0].mxu0 %v1689
        %v1757 = vpop.f32.mrb[0].mxu0
        %v1758 = vadd.f32 %v1685, %v1757
        %v1759 = vpop.f32.mrb[0].mxu0
        %1760 = vdwg.mxu0
        %v1762 = vlaneseq
        %v1763 = vshrl.u32 %v1762, 7
        %v1764 = vsub.s32 0, %v1763
        %v1765 = vrot.slane %v603, %v1764
        %v1767 = vadd.f32 %v1612, %v1765
        %v1768 = vadd.f32 %v1758, %v1765
        %v1769 = vld [vmem:[%s8] sm:$0xff]
        %v1770 = vld [vmem:[%s8 + $0x8] sm:$0xff]
        %v1771 = vld [vmem:[%s8 + $0x10] sm:$0xff]
        %v1772 = vld [vmem:[%s8 + $0x18] sm:$0xff]
        %v1773 = vld [vmem:[%s8 + $0x20] sm:$0xff]
        %v1774 = vld [vmem:[%s8 + $0x28] sm:$0xff]
        %v1775 = vld [vmem:[%s8 + $0x30] sm:$0xff]
        %v1776 = vld [vmem:[%s8 + $0x38] sm:$0xff]
        %v1777 = vld [vmem:[%s9] sm:$0x1]
        %v1778 = vld [vmem:[%s10] sm:$0x1]
        %v1779 = vld [vmem:[%s11] sm:$0x1]
        %v1780 = vld [vmem:[%s12] sm:$0xff]
        %v1781 = vld [vmem:[%s12 + $0x8] sm:$0xff]
        %v1782 = vld [vmem:[%s12 + $0x10] sm:$0xff]
        %v1783 = vld [vmem:[%s12 + $0x18] sm:$0xff]
        %v1784 = vld [vmem:[%s12 + $0x20] sm:$0xff]
        %v1785 = vld [vmem:[%s12 + $0x28] sm:$0xff]
        %v1786 = vld [vmem:[%s12 + $0x30] sm:$0xff]
        %v1787 = vld [vmem:[%s12 + $0x38] sm:$0xff]
        %v1788 = vld [vmem:[%s13] sm:$0x1]
        %v1790 = vsel %vm610, %v1767, 0
        %1792 = vmatprep.subr.mxu0 0.0
        %1793 = vmatpush1.msra.mxu0 %v1773
        %1794 = vmatprep.subr.mxu0 0.0
        %1795 = vmatpush1.msra.mxu0 %v1774
        %1796 = vmatprep.subr.mxu0 0.0
        %1797 = vmatpush1.msra.mxu0 %v1775
        %1798 = vmatprep.subr.mxu0 0.0
        %1799 = vmatpush1.msra.mxu0 %v1776
        %1800 = vmatprep.subr.mxu0 0.0
        %1801 = vmatpush1.msra.mxu0 0.0
        %1802 = vmatprep.subr.mxu0 0.0
        %1803 = vmatpush1.msra.mxu0 0.0
        %1804 = vmatprep.subr.mxu0 0.0
        %1805 = vmatpush1.msra.mxu0 0.0
        %1806 = vmatprep.subr.mxu0 0.0
        %1807 = vmatpush1.msra.mxu0 0.0
        %1808 = vmatprep.subr.mxu0 0.0
        %1809 = vmatpush1.msra.mxu0 0.0
        %1810 = vmatprep.subr.mxu0 0.0
        %1811 = vmatpush1.msra.mxu0 0.0
        %1812 = vmatprep.subr.mxu0 0.0
        %1813 = vmatpush1.msra.mxu0 0.0
        %1814 = vmatprep.subr.mxu0 0.0
        %1815 = vmatpush1.msra.mxu0 0.0
        %1816 = vmatprep.subr.mxu0 0.0
        %1817 = vmatpush1.msra.mxu0 0.0
        %1818 = vmatprep.subr.mxu0 0.0
        %1819 = vmatpush1.msra.mxu0 0.0
        %1820 = vmatprep.subr.mxu0 0.0
        %1821 = vmatpush1.msra.mxu0 0.0
        %1822 = vmatprep.subr.mxu0 0.0
        %1823 = vmatpush1.msra.mxu0 0.0
        %1824 = vmatprep.subr.mxu0 0.0
        %1825 = vmatpush1.msra.mxu0 0.0
        %1826 = vmatprep.subr.mxu0 0.0
        %1827 = vmatpush1.msra.mxu0 0.0
        %1828 = vmatprep.subr.mxu0 0.0
        %1829 = vmatpush1.msra.mxu0 0.0
        %1830 = vmatprep.subr.mxu0 0.0
        %1831 = vmatpush1.msra.mxu0 0.0
        %1832 = vmatprep.subr.mxu0 0.0
        %1833 = vmatpush1.msra.mxu0 0.0
        %1834 = vmatprep.subr.mxu0 0.0
        %1835 = vmatpush1.msra.mxu0 0.0
        %1836 = vmatprep.subr.mxu0 0.0
        %1837 = vmatpush1.msra.mxu0 0.0
        %1838 = vmatprep.subr.mxu0 0.0
        %1839 = vmatpush1.msra.mxu0 0.0
        %1840 = vmatprep.subr.mxu0 0.0
        %1841 = vmatpush1.msra.mxu0 0.0
        %1842 = vmatprep.subr.mxu0 0.0
        %1843 = vmatpush1.msra.mxu0 0.0
        %1844 = vmatprep.subr.mxu0 0.0
        %1845 = vmatpush1.msra.mxu0 0.0
        %1846 = vmatprep.subr.mxu0 0.0
        %1847 = vmatpush1.msra.mxu0 0.0
        %1848 = vmatprep.subr.mxu0 0.0
        %1849 = vmatpush1.msra.mxu0 0.0
        %1850 = vmatprep.subr.mxu0 0.0
        %1851 = vmatpush1.msra.mxu0 0.0
        %1852 = vmatprep.subr.mxu0 0.0
        %1853 = vmatpush1.msra.mxu0 0.0
        %1854 = vmatprep.subr.mxu0 0.0
        %1855 = vmatpush1.msra.mxu0 0.0
        %1856 = vmatprep.mubr.f32.mxu0 0.0
        %1857 = vmatmul.mubr.f32.gmra.mrb[0].mxu0 %v1790
        %v1858 = vpop.f32.mrb[0].mxu0
        %v1859 = vadd.f32 0.0, %v1858
        %v1860 = vpop.f32.mrb[0].mxu0
        %1861 = vdwg.mxu0
        %1862 = vmatprep.subr.mxu0 0.0
        %1863 = vmatpush1.msra.mxu0 %v1769
        %1864 = vmatprep.subr.mxu0 0.0
        %1865 = vmatpush1.msra.mxu0 %v1770
        %1866 = vmatprep.subr.mxu0 0.0
        %1867 = vmatpush1.msra.mxu0 %v1771
        %1868 = vmatprep.subr.mxu0 0.0
        %1869 = vmatpush1.msra.mxu0 %v1772
        %1870 = vmatprep.subr.mxu0 0.0
        %1871 = vmatpush1.msra.mxu0 0.0
        %1872 = vmatprep.subr.mxu0 0.0
        %1873 = vmatpush1.msra.mxu0 0.0
        %1874 = vmatprep.subr.mxu0 0.0
        %1875 = vmatpush1.msra.mxu0 0.0
        %1876 = vmatprep.subr.mxu0 0.0
        %1877 = vmatpush1.msra.mxu0 0.0
        %1878 = vmatprep.subr.mxu0 0.0
        %1879 = vmatpush1.msra.mxu0 0.0
        %1880 = vmatprep.subr.mxu0 0.0
        %1881 = vmatpush1.msra.mxu0 0.0
        %1882 = vmatprep.subr.mxu0 0.0
        %1883 = vmatpush1.msra.mxu0 0.0
        %1884 = vmatprep.subr.mxu0 0.0
        %1885 = vmatpush1.msra.mxu0 0.0
        %1886 = vmatprep.subr.mxu0 0.0
        %1887 = vmatpush1.msra.mxu0 0.0
        %1888 = vmatprep.subr.mxu0 0.0
        %1889 = vmatpush1.msra.mxu0 0.0
        %1890 = vmatprep.subr.mxu0 0.0
        %1891 = vmatpush1.msra.mxu0 0.0
        %1892 = vmatprep.subr.mxu0 0.0
        %1893 = vmatpush1.msra.mxu0 0.0
        %1894 = vmatprep.subr.mxu0 0.0
        %1895 = vmatpush1.msra.mxu0 0.0
        %1896 = vmatprep.subr.mxu0 0.0
        %1897 = vmatpush1.msra.mxu0 0.0
        %1898 = vmatprep.subr.mxu0 0.0
        %1899 = vmatpush1.msra.mxu0 0.0
        %1900 = vmatprep.subr.mxu0 0.0
        %1901 = vmatpush1.msra.mxu0 0.0
        %1902 = vmatprep.subr.mxu0 0.0
        %1903 = vmatpush1.msra.mxu0 0.0
        %1904 = vmatprep.subr.mxu0 0.0
        %1905 = vmatpush1.msra.mxu0 0.0
        %1906 = vmatprep.subr.mxu0 0.0
        %1907 = vmatpush1.msra.mxu0 0.0
        %1908 = vmatprep.subr.mxu0 0.0
        %1909 = vmatpush1.msra.mxu0 0.0
        %1910 = vmatprep.subr.mxu0 0.0
        %1911 = vmatpush1.msra.mxu0 0.0
        %1912 = vmatprep.subr.mxu0 0.0
        %1913 = vmatpush1.msra.mxu0 0.0
        %1914 = vmatprep.subr.mxu0 0.0
        %1915 = vmatpush1.msra.mxu0 0.0
        %1916 = vmatprep.subr.mxu0 0.0
        %1917 = vmatpush1.msra.mxu0 0.0
        %1918 = vmatprep.subr.mxu0 0.0
        %1919 = vmatpush1.msra.mxu0 0.0
        %1920 = vmatprep.subr.mxu0 0.0
        %1921 = vmatpush1.msra.mxu0 0.0
        %1922 = vmatprep.subr.mxu0 0.0
        %1923 = vmatpush1.msra.mxu0 0.0
        %1924 = vmatprep.subr.mxu0 0.0
        %1925 = vmatpush1.msra.mxu0 0.0
        %1926 = vmatprep.mubr.f32.mxu0 0.0
        %1927 = vmatmul.mubr.f32.gmra.mrb[0].mxu0 %v612
        %v1928 = vpop.f32.mrb[0].mxu0
        %v1929 = vadd.f32 %v1859, %v1928
        %v1930 = vpop.f32.mrb[0].mxu0
        %1931 = vdwg.mxu0
        %v1933 = vlaneseq
        %v1934 = vshrl.u32 %v1933, 7
        %v1935 = vsub.s32 0, %v1934
        %v1936 = vrot.slane %v1777, %v1935
        %v1938 = vadd.f32 %v1929, %v1936
        %vm1939 = vcmask 523264
        %v1940 = vsel %vm1939, %v1938, 0.0
        %1941 = vadd.xlane.f32.xlu0 %v1940
        %v1942 = vpop.xlane.xlu0 %1941
        %v1943 = vrcp.pop 64.0
        %v1944 = vmul.f32 %v1942, %v1943
        %v1945 = vsub.f32 %v1938, %v1944
        %v1946 = vmul.f32 %v1945, %v1945
        %v1947 = vsel %vm1939, %v1946, 0.0
        %1948 = vadd.xlane.f32.xlu0 %v1947
        %v1949 = vpop.xlane.xlu0 %1948
        %v1950 = vmul.f32 %v1949, %v1943
        %v1951 = vadd.f32 %v1950, 1e-05
        %v1952 = vrsqrt.pop %v1951
        %v1953 = vmul.f32 %v1945, %v1952
        %v1955 = vlaneseq
        %v1956 = vshrl.u32 %v1955, 7
        %v1957 = vsub.s32 0, %v1956
        %v1958 = vrot.slane %v1778, %v1957
        %v1960 = vmul.f32 %v1953, %v1958
        %v1962 = vlaneseq
        %v1963 = vshrl.u32 %v1962, 7
        %v1964 = vsub.s32 0, %v1963
        %v1965 = vrot.slane %v1779, %v1964
        %v1967 = vadd.f32 %v1960, %v1965
        %v1968 = vmul.f32 %v1967, 0.5
        %v1969 = vmul.f32 %v1967, 0.70710677
        %v1970 = vand.u32 2147483647, %v1969
        %v1971 = vmul.f32 %v1970, 0.3275911
        %v1972 = vadd.f32 %v1971, 1.0
        %v1973 = vrcp.pop %v1972
        %v1974 = vmul.f32 1.0, %v1973
        %v1975 = vmul.f32 %v1974, 1.0614054
        %v1976 = vadd.f32 %v1975, -1.4531521
        %v1977 = vmul.f32 %v1974, %v1976
        %v1978 = vadd.f32 %v1977, 1.4214138
        %v1979 = vmul.f32 %v1974, %v1978
        %v1980 = vadd.f32 %v1979, -0.28449672
        %v1981 = vmul.f32 %v1974, %v1980
        %v1982 = vadd.f32 %v1981, 0.2548296
        %v1983 = vmul.f32 %v1974, %v1982
        %v1984 = vsub.f32 0.0, %v1970
        %v1985 = vmul.f32 %v1984, %v1970
        %v1986 = vmul.f32 %v1985, 1.442695
        %v1987 = vpow.pop %v1986
        %v1988 = vmul.f32 %v1983, %v1987
        %v1989 = vsub.f32 1.0, %v1988
        %vm1990 = vcmp.ge.f32.partialorder %v1969, 0.0
        %v1991 = vsub.f32 0.0, %v1989
        %v1992 = vsel %vm1990, %v1989, %v1991
        %v1993 = vadd.f32 %v1992, 1.0
        %v1994 = vmul.f32 %v1968, %v1993
        %v1996 = vsel %vm1939, %v1994, 0
        %1998 = vmatprep.subr.mxu0 0.0
        %1999 = vmatpush1.msra.mxu0 %v1780
        %2000 = vmatprep.subr.mxu0 0.0
        %2001 = vmatpush1.msra.mxu0 %v1781
        %2002 = vmatprep.subr.mxu0 0.0
        %2003 = vmatpush1.msra.mxu0 %v1782
        %2004 = vmatprep.subr.mxu0 0.0
        %2005 = vmatpush1.msra.mxu0 %v1783
        %2006 = vmatprep.subr.mxu0 0.0
        %2007 = vmatpush1.msra.mxu0 %v1784
        %2008 = vmatprep.subr.mxu0 0.0
        %2009 = vmatpush1.msra.mxu0 %v1785
        %2010 = vmatprep.subr.mxu0 0.0
        %2011 = vmatpush1.msra.mxu0 %v1786
        %2012 = vmatprep.subr.mxu0 0.0
        %2013 = vmatpush1.msra.mxu0 %v1787
        %2014 = vmatprep.subr.mxu0 0.0
        %2015 = vmatpush1.msra.mxu0 0.0
        %2016 = vmatprep.subr.mxu0 0.0
        %2017 = vmatpush1.msra.mxu0 0.0
        %2018 = vmatprep.subr.mxu0 0.0
        %2019 = vmatpush1.msra.mxu0 0.0
        %2020 = vmatprep.subr.mxu0 0.0
        %2021 = vmatpush1.msra.mxu0 0.0
        %2022 = vmatprep.subr.mxu0 0.0
        %2023 = vmatpush1.msra.mxu0 0.0
        %2024 = vmatprep.subr.mxu0 0.0
        %2025 = vmatpush1.msra.mxu0 0.0
        %2026 = vmatprep.subr.mxu0 0.0
        %2027 = vmatpush1.msra.mxu0 0.0
        %2028 = vmatprep.subr.mxu0 0.0
        %2029 = vmatpush1.msra.mxu0 0.0
        %2030 = vmatprep.subr.mxu0 0.0
        %2031 = vmatpush1.msra.mxu0 0.0
        %2032 = vmatprep.subr.mxu0 0.0
        %2033 = vmatpush1.msra.mxu0 0.0
        %2034 = vmatprep.subr.mxu0 0.0
        %2035 = vmatpush1.msra.mxu0 0.0
        %2036 = vmatprep.subr.mxu0 0.0
        %2037 = vmatpush1.msra.mxu0 0.0
        %2038 = vmatprep.subr.mxu0 0.0
        %2039 = vmatpush1.msra.mxu0 0.0
        %2040 = vmatprep.subr.mxu0 0.0
        %2041 = vmatpush1.msra.mxu0 0.0
        %2042 = vmatprep.subr.mxu0 0.0
        %2043 = vmatpush1.msra.mxu0 0.0
        %2044 = vmatprep.subr.mxu0 0.0
        %2045 = vmatpush1.msra.mxu0 0.0
        %2046 = vmatprep.subr.mxu0 0.0
        %2047 = vmatpush1.msra.mxu0 0.0
        %2048 = vmatprep.subr.mxu0 0.0
        %2049 = vmatpush1.msra.mxu0 0.0
        %2050 = vmatprep.subr.mxu0 0.0
        %2051 = vmatpush1.msra.mxu0 0.0
        %2052 = vmatprep.subr.mxu0 0.0
        %2053 = vmatpush1.msra.mxu0 0.0
        %2054 = vmatprep.subr.mxu0 0.0
        %2055 = vmatpush1.msra.mxu0 0.0
        %2056 = vmatprep.subr.mxu0 0.0
        %2057 = vmatpush1.msra.mxu0 0.0
        %2058 = vmatprep.subr.mxu0 0.0
        %2059 = vmatpush1.msra.mxu0 0.0
        %2060 = vmatprep.subr.mxu0 0.0
        %2061 = vmatpush1.msra.mxu0 0.0
        %2062 = vmatprep.mubr.f32.mxu0 0.0
        %2063 = vmatmul.mubr.f32.gmra.mrb[0].mxu0 %v1996
        %v2064 = vpop.f32.mrb[0].mxu0
        %v2065 = vadd.f32 0.0, %v2064
        %v2066 = vpop.f32.mrb[0].mxu0
        %2067 = vdwg.mxu0
        %v2068 = vadd.f32 %v587, %v2065
        %v2070 = vlaneseq
        %v2071 = vshrl.u32 %v2070, 7
        %v2072 = vsub.s32 0, %v2071
        %v2073 = vrot.slane %v1788, %v2072
        %v2075 = vadd.f32 %v2068, %v2073
        %2076 = vst.msk [vmem:[%s579] sm:$0xff] %vm610, %v2075
        %v2078 = vsel %vm610, %v1768, 0
        %2080 = vmatprep.subr.mxu0 0.0
        %2081 = vmatpush1.msra.mxu0 %v1773
        %2082 = vmatprep.subr.mxu0 0.0
        %2083 = vmatpush1.msra.mxu0 %v1774
        %2084 = vmatprep.subr.mxu0 0.0
        %2085 = vmatpush1.msra.mxu0 %v1775
        %2086 = vmatprep.subr.mxu0 0.0
        %2087 = vmatpush1.msra.mxu0 %v1776
        %2088 = vmatprep.subr.mxu0 0.0
        %2089 = vmatpush1.msra.mxu0 0.0
        %2090 = vmatprep.subr.mxu0 0.0
        %2091 = vmatpush1.msra.mxu0 0.0
        %2092 = vmatprep.subr.mxu0 0.0
        %2093 = vmatpush1.msra.mxu0 0.0
        %2094 = vmatprep.subr.mxu0 0.0
        %2095 = vmatpush1.msra.mxu0 0.0
        %2096 = vmatprep.subr.mxu0 0.0
        %2097 = vmatpush1.msra.mxu0 0.0
        %2098 = vmatprep.subr.mxu0 0.0
        %2099 = vmatpush1.msra.mxu0 0.0
        %2100 = vmatprep.subr.mxu0 0.0
        %2101 = vmatpush1.msra.mxu0 0.0
        %2102 = vmatprep.subr.mxu0 0.0
        %2103 = vmatpush1.msra.mxu0 0.0
        %2104 = vmatprep.subr.mxu0 0.0
        %2105 = vmatpush1.msra.mxu0 0.0
        %2106 = vmatprep.subr.mxu0 0.0
        %2107 = vmatpush1.msra.mxu0 0.0
        %2108 = vmatprep.subr.mxu0 0.0
        %2109 = vmatpush1.msra.mxu0 0.0
        %2110 = vmatprep.subr.mxu0 0.0
        %2111 = vmatpush1.msra.mxu0 0.0
        %2112 = vmatprep.subr.mxu0 0.0
        %2113 = vmatpush1.msra.mxu0 0.0
        %2114 = vmatprep.subr.mxu0 0.0
        %2115 = vmatpush1.msra.mxu0 0.0
        %2116 = vmatprep.subr.mxu0 0.0
        %2117 = vmatpush1.msra.mxu0 0.0
        %2118 = vmatprep.subr.mxu0 0.0
        %2119 = vmatpush1.msra.mxu0 0.0
        %2120 = vmatprep.subr.mxu0 0.0
        %2121 = vmatpush1.msra.mxu0 0.0
        %2122 = vmatprep.subr.mxu0 0.0
        %2123 = vmatpush1.msra.mxu0 0.0
        %2124 = vmatprep.subr.mxu0 0.0
        %2125 = vmatpush1.msra.mxu0 0.0
        %2126 = vmatprep.subr.mxu0 0.0
        %2127 = vmatpush1.msra.mxu0 0.0
        %2128 = vmatprep.subr.mxu0 0.0
        %2129 = vmatpush1.msra.mxu0 0.0
        %2130 = vmatprep.subr.mxu0 0.0
        %2131 = vmatpush1.msra.mxu0 0.0
        %2132 = vmatprep.subr.mxu0 0.0
        %2133 = vmatpush1.msra.mxu0 0.0
        %2134 = vmatprep.subr.mxu0 0.0
        %2135 = vmatpush1.msra.mxu0 0.0
        %2136 = vmatprep.subr.mxu0 0.0
        %2137 = vmatpush1.msra.mxu0 0.0
        %2138 = vmatprep.subr.mxu0 0.0
        %2139 = vmatpush1.msra.mxu0 0.0
        %2140 = vmatprep.subr.mxu0 0.0
        %2141 = vmatpush1.msra.mxu0 0.0
        %2142 = vmatprep.subr.mxu0 0.0
        %2143 = vmatpush1.msra.mxu0 0.0
        %2144 = vmatprep.mubr.f32.mxu0 0.0
        %2145 = vmatmul.mubr.f32.gmra.mrb[0].mxu0 %v2078
        %v2146 = vpop.f32.mrb[0].mxu0
        %v2147 = vadd.f32 0.0, %v2146
        %v2148 = vpop.f32.mrb[0].mxu0
        %2149 = vdwg.mxu0
        %2150 = vmatprep.subr.mxu0 0.0
        %2151 = vmatpush1.msra.mxu0 %v1769
        %2152 = vmatprep.subr.mxu0 0.0
        %2153 = vmatpush1.msra.mxu0 %v1770
        %2154 = vmatprep.subr.mxu0 0.0
        %2155 = vmatpush1.msra.mxu0 %v1771
        %2156 = vmatprep.subr.mxu0 0.0
        %2157 = vmatpush1.msra.mxu0 %v1772
        %2158 = vmatprep.subr.mxu0 0.0
        %2159 = vmatpush1.msra.mxu0 0.0
        %2160 = vmatprep.subr.mxu0 0.0
        %2161 = vmatpush1.msra.mxu0 0.0
        %2162 = vmatprep.subr.mxu0 0.0
        %2163 = vmatpush1.msra.mxu0 0.0
        %2164 = vmatprep.subr.mxu0 0.0
        %2165 = vmatpush1.msra.mxu0 0.0
        %2166 = vmatprep.subr.mxu0 0.0
        %2167 = vmatpush1.msra.mxu0 0.0
        %2168 = vmatprep.subr.mxu0 0.0
        %2169 = vmatpush1.msra.mxu0 0.0
        %2170 = vmatprep.subr.mxu0 0.0
        %2171 = vmatpush1.msra.mxu0 0.0
        %2172 = vmatprep.subr.mxu0 0.0
        %2173 = vmatpush1.msra.mxu0 0.0
        %2174 = vmatprep.subr.mxu0 0.0
        %2175 = vmatpush1.msra.mxu0 0.0
        %2176 = vmatprep.subr.mxu0 0.0
        %2177 = vmatpush1.msra.mxu0 0.0
        %2178 = vmatprep.subr.mxu0 0.0
        %2179 = vmatpush1.msra.mxu0 0.0
        %2180 = vmatprep.subr.mxu0 0.0
        %2181 = vmatpush1.msra.mxu0 0.0
        %2182 = vmatprep.subr.mxu0 0.0
        %2183 = vmatpush1.msra.mxu0 0.0
        %2184 = vmatprep.subr.mxu0 0.0
        %2185 = vmatpush1.msra.mxu0 0.0
        %2186 = vmatprep.subr.mxu0 0.0
        %2187 = vmatpush1.msra.mxu0 0.0
        %2188 = vmatprep.subr.mxu0 0.0
        %2189 = vmatpush1.msra.mxu0 0.0
        %2190 = vmatprep.subr.mxu0 0.0
        %2191 = vmatpush1.msra.mxu0 0.0
        %2192 = vmatprep.subr.mxu0 0.0
        %2193 = vmatpush1.msra.mxu0 0.0
        %2194 = vmatprep.subr.mxu0 0.0
        %2195 = vmatpush1.msra.mxu0 0.0
        %2196 = vmatprep.subr.mxu0 0.0
        %2197 = vmatpush1.msra.mxu0 0.0
        %2198 = vmatprep.subr.mxu0 0.0
        %2199 = vmatpush1.msra.mxu0 0.0
        %2200 = vmatprep.subr.mxu0 0.0
        %2201 = vmatpush1.msra.mxu0 0.0
        %2202 = vmatprep.subr.mxu0 0.0
        %2203 = vmatpush1.msra.mxu0 0.0
        %2204 = vmatprep.subr.mxu0 0.0
        %2205 = vmatpush1.msra.mxu0 0.0
        %2206 = vmatprep.subr.mxu0 0.0
        %2207 = vmatpush1.msra.mxu0 0.0
        %2208 = vmatprep.subr.mxu0 0.0
        %2209 = vmatpush1.msra.mxu0 0.0
        %2210 = vmatprep.subr.mxu0 0.0
        %2211 = vmatpush1.msra.mxu0 0.0
        %2212 = vmatprep.subr.mxu0 0.0
        %2213 = vmatpush1.msra.mxu0 0.0
        %2214 = vmatprep.mubr.f32.mxu0 0.0
        %2215 = vmatmul.mubr.f32.gmra.mrb[0].mxu0 %v685
        %v2216 = vpop.f32.mrb[0].mxu0
        %v2217 = vadd.f32 %v2147, %v2216
        %v2218 = vpop.f32.mrb[0].mxu0
        %2219 = vdwg.mxu0
        %v2220 = vadd.f32 %v2217, %v1936
        %v2221 = vsel %vm1939, %v2220, 0.0
        %2222 = vadd.xlane.f32.xlu0 %v2221
        %v2223 = vpop.xlane.xlu0 %2222
        %v2224 = vmul.f32 %v2223, %v1943
        %v2225 = vsub.f32 %v2220, %v2224
        %v2226 = vmul.f32 %v2225, %v2225
        %v2227 = vsel %vm1939, %v2226, 0.0
        %2228 = vadd.xlane.f32.xlu0 %v2227
        %v2229 = vpop.xlane.xlu0 %2228
        %v2230 = vmul.f32 %v2229, %v1943
        %v2231 = vadd.f32 %v2230, 1e-05
        %v2232 = vrsqrt.pop %v2231
        %v2233 = vmul.f32 %v2225, %v2232
        %v2234 = vmul.f32 %v2233, %v1958
        %v2235 = vadd.f32 %v2234, %v1965
        %v2236 = vmul.f32 %v2235, 0.5
        %v2237 = vmul.f32 %v2235, 0.70710677
        %v2238 = vand.u32 2147483647, %v2237
        %v2239 = vmul.f32 %v2238, 0.3275911
        %v2240 = vadd.f32 %v2239, 1.0
        %v2241 = vrcp.pop %v2240
        %v2242 = vmul.f32 1.0, %v2241
        %v2243 = vmul.f32 %v2242, 1.0614054
        %v2244 = vadd.f32 %v2243, -1.4531521
        %v2245 = vmul.f32 %v2242, %v2244
        %v2246 = vadd.f32 %v2245, 1.4214138
        %v2247 = vmul.f32 %v2242, %v2246
        %v2248 = vadd.f32 %v2247, -0.28449672
        %v2249 = vmul.f32 %v2242, %v2248
        %v2250 = vadd.f32 %v2249, 0.2548296
        %v2251 = vmul.f32 %v2242, %v2250
        %v2252 = vsub.f32 0.0, %v2238
        %v2253 = vmul.f32 %v2252, %v2238
        %v2254 = vmul.f32 %v2253, 1.442695
        %v2255 = vpow.pop %v2254
        %v2256 = vmul.f32 %v2251, %v2255
        %v2257 = vsub.f32 1.0, %v2256
        %vm2258 = vcmp.ge.f32.partialorder %v2237, 0.0
        %v2259 = vsub.f32 0.0, %v2257
        %v2260 = vsel %vm2258, %v2257, %v2259
        %v2261 = vadd.f32 %v2260, 1.0
        %v2262 = vmul.f32 %v2236, %v2261
        %v2264 = vsel %vm1939, %v2262, 0
        %2266 = vmatprep.subr.mxu0 0.0
        %2267 = vmatpush1.msra.mxu0 %v1780
        %2268 = vmatprep.subr.mxu0 0.0
        %2269 = vmatpush1.msra.mxu0 %v1781
        %2270 = vmatprep.subr.mxu0 0.0
        %2271 = vmatpush1.msra.mxu0 %v1782
        %2272 = vmatprep.subr.mxu0 0.0
        %2273 = vmatpush1.msra.mxu0 %v1783
        %2274 = vmatprep.subr.mxu0 0.0
        %2275 = vmatpush1.msra.mxu0 %v1784
        %2276 = vmatprep.subr.mxu0 0.0
        %2277 = vmatpush1.msra.mxu0 %v1785
        %2278 = vmatprep.subr.mxu0 0.0
        %2279 = vmatpush1.msra.mxu0 %v1786
        %2280 = vmatprep.subr.mxu0 0.0
        %2281 = vmatpush1.msra.mxu0 %v1787
        %2282 = vmatprep.subr.mxu0 0.0
        %2283 = vmatpush1.msra.mxu0 0.0
        %2284 = vmatprep.subr.mxu0 0.0
        %2285 = vmatpush1.msra.mxu0 0.0
        %2286 = vmatprep.subr.mxu0 0.0
        %2287 = vmatpush1.msra.mxu0 0.0
        %2288 = vmatprep.subr.mxu0 0.0
        %2289 = vmatpush1.msra.mxu0 0.0
        %2290 = vmatprep.subr.mxu0 0.0
        %2291 = vmatpush1.msra.mxu0 0.0
        %2292 = vmatprep.subr.mxu0 0.0
        %2293 = vmatpush1.msra.mxu0 0.0
        %2294 = vmatprep.subr.mxu0 0.0
        %2295 = vmatpush1.msra.mxu0 0.0
        %2296 = vmatprep.subr.mxu0 0.0
        %2297 = vmatpush1.msra.mxu0 0.0
        %2298 = vmatprep.subr.mxu0 0.0
        %2299 = vmatpush1.msra.mxu0 0.0
        %2300 = vmatprep.subr.mxu0 0.0
        %2301 = vmatpush1.msra.mxu0 0.0
        %2302 = vmatprep.subr.mxu0 0.0
        %2303 = vmatpush1.msra.mxu0 0.0
        %2304 = vmatprep.subr.mxu0 0.0
        %2305 = vmatpush1.msra.mxu0 0.0
        %2306 = vmatprep.subr.mxu0 0.0
        %2307 = vmatpush1.msra.mxu0 0.0
        %2308 = vmatprep.subr.mxu0 0.0
        %2309 = vmatpush1.msra.mxu0 0.0
        %2310 = vmatprep.subr.mxu0 0.0
        %2311 = vmatpush1.msra.mxu0 0.0
        %2312 = vmatprep.subr.mxu0 0.0
        %2313 = vmatpush1.msra.mxu0 0.0
        %2314 = vmatprep.subr.mxu0 0.0
        %2315 = vmatpush1.msra.mxu0 0.0
        %2316 = vmatprep.subr.mxu0 0.0
        %2317 = vmatpush1.msra.mxu0 0.0
        %2318 = vmatprep.subr.mxu0 0.0
        %2319 = vmatpush1.msra.mxu0 0.0
        %2320 = vmatprep.subr.mxu0 0.0
        %2321 = vmatpush1.msra.mxu0 0.0
        %2322 = vmatprep.subr.mxu0 0.0
        %2323 = vmatpush1.msra.mxu0 0.0
        %2324 = vmatprep.subr.mxu0 0.0
        %2325 = vmatpush1.msra.mxu0 0.0
        %2326 = vmatprep.subr.mxu0 0.0
        %2327 = vmatpush1.msra.mxu0 0.0
        %2328 = vmatprep.subr.mxu0 0.0
        %2329 = vmatpush1.msra.mxu0 0.0
        %2330 = vmatprep.mubr.f32.mxu0 0.0
        %2331 = vmatmul.mubr.f32.gmra.mrb[0].mxu0 %v2264
        %v2332 = vpop.f32.mrb[0].mxu0
        %v2333 = vadd.f32 0.0, %v2332
        %v2334 = vpop.f32.mrb[0].mxu0
        %2335 = vdwg.mxu0
        %v2336 = vadd.f32 %v588, %v2333
        %v2337 = vadd.f32 %v2336, %v2073
        %2338 = vst.msk [vmem:[%s586] sm:$0xff] %vm610, %v2337
        %s2339 = sand.u32 %s352, 1
        %s2340 = scalar_lea.sflag [#allocation4], %s2339
        %s2341 = sand.u32 %s352, 1
        %s2342 = smul.addr %s2341, 8
        %s2343 = scalar_lea.vmem [#allocation10], %s2342
        %s2344 = sand.u32 %s378, 1
        %s2345 = scalar_lea.sflag [#allocation12], %s2344
        %s2346 = sand.u32 %s378, 1
        %s2347 = smul.addr %s2346, 8
        %s2348 = scalar_lea.vmem [#allocation11], %s2347
        // Predicated region
        $region93: #{tpu_custom_call.1} parent=75 // pred_check
          %p2349 = pneg %p362
        $region94: #{tpu_custom_call.1} parent=75 // pred_check_branch
          %2351 = sbr.rel (%p2349) target = $region96
        $region95: #{tpu_custom_call.1} parent=75 // pred_region
          %s2353 = ssub.s32 128, 128
          %2354 = vsyncadd %s2340, %s2353
          %s2355 = smul.addr %s40, 128
          %s2356 = scalar_lea.hbm %s14, %s2355
          %s2358 = sshll.u32 %s2343, 4
          %s2359 = int_to_ptr.vmem [resolvable:$true] %s2358
          %2361 = dma.vmem_to_hbm [thread:$0]  %s2359, 128, %s2356, %s2340
        $region96: #{tpu_custom_call.1} parent=75 // pred_fallthru
          _
        // Predicated region
        $region97: #{tpu_custom_call.1} parent=75 // pred_check
          %p2362 = pneg %p388
        $region98: #{tpu_custom_call.1} parent=75 // pred_check_branch
          %2364 = sbr.rel (%p2362) target = $region100
        $region99: #{tpu_custom_call.1} parent=75 // pred_region
          %s2366 = ssub.s32 128, 128
          %2367 = vsyncadd %s2345, %s2366
          %s2368 = smul.addr %s40, 128
          %s2369 = scalar_lea.hbm %s15, %s2368
          %s2371 = sshll.u32 %s2348, 4
          %s2372 = int_to_ptr.vmem [resolvable:$true] %s2371
          %2374 = dma.vmem_to_hbm [thread:$0]  %s2372, 128, %s2369, %s2345
        $region100: #{tpu_custom_call.1} parent=75 // pred_fallthru
          _
      $region76: #{tpu_custom_call.1} parent=5 // pred_fallthru
        _
      %p2375 = scmp.le.s32.totalorder 2, %s35
      // Predicated region
      $region101: #{tpu_custom_call.1} parent=5 // pred_check
        %p2376 = pneg %p2375
      $region102: #{tpu_custom_call.1} parent=5 // pred_check_branch
        %2378 = sbr.rel (%p2376) target = $region104
      $region103: #{tpu_custom_call.1} parent=5 // pred_region
        %s2379 = ssub.s32 %s35, 2
        // Predicated region
        $region105: #{tpu_custom_call.1} parent=103 // pred_check
          %p2380 = pneg %p368
        $region106: #{tpu_custom_call.1} parent=103 // pred_check_branch
          %2382 = sbr.rel (%p2380) target = $region108
        $region107: #{tpu_custom_call.1} parent=103 // pred_region
          %s2383 = sand.u32 %s353, 1
          %s2384 = scalar_lea.sflag [#allocation4], %s2383
          %s2385 = sand.u32 %s353, 1
          %s2386 = smul.addr %s2385, 8
          %s2387 = scalar_lea.vmem [#allocation10], %s2386
          %2388 = dma.done %s2384, 128
        $region108: #{tpu_custom_call.1} parent=103 // pred_fallthru
          _
        // Predicated region
        $region109: #{tpu_custom_call.1} parent=103 // pred_check
          %p2389 = pneg %p394
        $region110: #{tpu_custom_call.1} parent=103 // pred_check_branch
          %2391 = sbr.rel (%p2389) target = $region112
        $region111: #{tpu_custom_call.1} parent=103 // pred_region
          %s2392 = sand.u32 %s379, 1
          %s2393 = scalar_lea.sflag [#allocation12], %s2392
          %s2394 = sand.u32 %s379, 1
          %s2395 = smul.addr %s2394, 8
          %s2396 = scalar_lea.vmem [#allocation11], %s2395
          %2397 = dma.done %s2393, 128
        $region112: #{tpu_custom_call.1} parent=103 // pred_fallthru
          _
      $region104: #{tpu_custom_call.1} parent=5 // pred_fallthru
        _
    $region6: #{tpu_custom_call.1} parent=1 // loop_footer
      %s39 = sadd.s32 1, %s35
    $region7: #{tpu_custom_call.1} parent=1 // loop_footer_branch
      %34 = sbr.rel target = $region3
    $region8: #{tpu_custom_call.1} parent=1 // loop_exit
      _
    %2398 = vsyncpa [#allocation3], 1
    %s2399 = scalar_lea.sflag [#allocation3], 1
    %2400 = vsyncpa %s2399, 1
    %2401 = vsyncpa [#allocation6], 1
    %s2402 = scalar_lea.sflag [#allocation6], 1
    %2403 = vsyncpa %s2402, 1
    %2404 = vsyncpa [#allocation9], 1
    %2405 = vsyncpa [#allocation4], 1
    %s2406 = scalar_lea.sflag [#allocation4], 1
    %2407 = vsyncpa %s2406, 1
    %2408 = vsyncpa [#allocation12], 1
    %s2409 = scalar_lea.sflag [#allocation12], 1
    %2410 = vsyncpa %s2409, 1

</llo_original>
